<compile_context>
chip_gen: v6e
topology: v6e:2x2x1
jax: 0.10.0
libtpu: 0.0.40
codegen_flags: <defaults>
</compile_context>

<pallas_src>
import functools
import math

import jax
import jax.numpy as jnp
from jax.experimental import pallas as pl
from jax.experimental.pallas import tpu as pltpu

EPS = 1e-5


def _layer_norm(x, w, b):
    # f32 elementwise math (v5e VPU/EUP have no bf16 path).
    mean = jnp.mean(x, axis=-1, keepdims=True)
    var = jnp.mean(jnp.square(x - mean), axis=-1, keepdims=True)
    return (x - mean) * jax.lax.rsqrt(var + EPS) * w + b


def transformer_layer_kernel(
    x_ref,
    ln1_w_ref, ln1_b_ref,
    wqkv_ref, bqkv_ref,
    wo_ref, bo_ref,
    ln2_w_ref, ln2_b_ref,
    w1_ref, b1_ref,
    w2_ref, b2_ref,
    *out_refs,
    num_heads, need_weights, compute_dtype,
):
    out_ref = out_refs[0]
    attn_ref = out_refs[1] if need_weights else None

    xb = x_ref[...].astype(jnp.float32)            # (Bt, S, E)
    Bt, S, E = xb.shape
    H = num_heads
    Dh = E // H
    scale = 1.0 / math.sqrt(Dh)
    cd = compute_dtype

    # Flatten batch*seq so projections / FFN see M = Bt*S rows.
    # (Leading-dim-only reshape; lane dim untouched.)
    x2d = xb.reshape(Bt * S, E)

    # ---------------- pre-LN 1 + fused QKV projection (single MXU matmul) ----
    xn = _layer_norm(x2d, ln1_w_ref[0], ln1_b_ref[0])
    qkv = jnp.dot(xn.astype(cd), wqkv_ref[...],
                  preferred_element_type=jnp.float32) + bqkv_ref[0]

    # Fold 1/sqrt(Dh) into q (H*S*Dh mults instead of H*S*S).
    q = (qkv[:, :E] * scale).astype(cd)
    k = qkv[:, E:2 * E].astype(cd)
    v = qkv[:, 2 * E:].astype(cd)

    # ---------------- batched multi-head attention ---------------------------
    # Build (H*Bt, S, Dh) head-major stacks using lane slices + leading-dim
    # reshapes + a major-axis concat (no lane-dim reshapes), then run both
    # attention contractions as single batched einsums (n = h*Bt + b).
    def head_stack(a):
        parts = [a[:, h * Dh:(h + 1) * Dh].reshape(Bt, S, Dh) for h in range(H)]
        return parts[0] if H == 1 else jnp.concatenate(parts, axis=0)

    qs = head_stack(q)
    ks = head_stack(k)
    vs = head_stack(v)

    s = jnp.einsum("nqd,nkd->nqk", qs, ks,
                   preferred_element_type=jnp.float32)        # (H*Bt, S, S)

    # softmax in f32; denominator reciprocal on the EUP slot
    m = jnp.max(s, axis=-1, keepdims=True)
    e = jnp.exp(s - m)
    denom = jnp.sum(e, axis=-1, keepdims=True)
    p = e * pl.reciprocal(denom, approx=True)                 # (H*Bt, S, S)
    # TODO(synk): attention_mask / dropout (train mode) not implemented; eval-mode semantics only.

    ctx = jnp.einsum("nqk,nkd->nqd", p.astype(cd), vs,
                     preferred_element_type=jnp.float32)      # (H*Bt, S, Dh)

    # Output projection without a lane-dim concat:
    #   attn_out = bo + sum_h ctx_h @ Wo[h*Dh:(h+1)*Dh, :]
    wo = wo_ref[...]
    acc = jnp.zeros((Bt * S, E), jnp.float32) + bo_ref[0]
    for h in range(H):
        ctx_h = ctx[h * Bt:(h + 1) * Bt].reshape(Bt * S, Dh).astype(cd)
        acc = acc + jnp.dot(ctx_h, wo[h * Dh:(h + 1) * Dh, :],
                            preferred_element_type=jnp.float32)
    attn_out = acc

    # residual 1
    x1 = x2d + attn_out

    # ---------------- pre-LN 2 + feed-forward --------------------------------
    xn2 = _layer_norm(x1, ln2_w_ref[0], ln2_b_ref[0])
    h1 = jnp.dot(xn2.astype(cd), w1_ref[...],
                 preferred_element_type=jnp.float32) + b1_ref[0]
    h1 = jnp.maximum(h1, 0.0)
    ff = jnp.dot(h1.astype(cd), w2_ref[...],
                 preferred_element_type=jnp.float32) + b2_ref[0]

    out_ref[...] = (x1 + ff).reshape(Bt, S, E).astype(out_ref.dtype)

    if need_weights:
        # nn.MultiheadAttention default: attention weights averaged over heads.
        p4 = p.reshape(H, Bt, S, S)
        attn_ref[...] = jnp.mean(p4, axis=0).astype(attn_ref.dtype)


def _choose_block_b(B, S, target_rows=512):
    """Largest divisor of B with block_b*S <= target_rows, keeping >= 2 grid
    steps when possible (so both v7x TensorCores get work)."""
    divisors = [d for d in range(1, B + 1) if B % d == 0]
    fits = [d for d in divisors if d * S <= target_rows] or [1]
    multi = [d for d in fits if B // d >= 2]
    return max(multi) if multi else max(fits)


def simple_transformer_layer(x, params, *, num_heads, need_weights=True,
                             block_b=None, compute_dtype=jnp.float32):
    B, S, E = x.shape
    F = params["w1"].shape[1]
    assert E % num_heads == 0
    if block_b is None:
        block_b = _choose_block_b(B, S)
    assert B % block_b == 0
    grid_b = B // block_b

    # Fused QKV (PyTorch in_proj row order q,k,v; already transposed to (in,out)).
    wqkv = jnp.concatenate([params["wq"], params["wk"], params["wv"]], axis=1)
    bqkv = jnp.concatenate([params["bq"], params["bk"], params["bv"]], axis=1)

    wdt = compute_dtype
    wqkv_c = wqkv.astype(wdt)
    wo_c = params["wo"].astype(wdt)
    w1_c = params["w1"].astype(wdt)
    w2_c = params["w2"].astype(wdt)

    def full_spec(shape):
        return pl.BlockSpec(shape, lambda b: (0,) * len(shape))

    in_specs = [
        pl.BlockSpec((block_b, S, E), lambda b: (b, 0, 0)),   # x
        full_spec((1, E)), full_spec((1, E)),                 # ln1 w, b
        full_spec((E, 3 * E)), full_spec((1, 3 * E)),         # W_qkv, b_qkv
        full_spec((E, E)), full_spec((1, E)),                 # Wo, bo
        full_spec((1, E)), full_spec((1, E)),                 # ln2 w, b
        full_spec((E, F)), full_spec((1, F)),                 # W1, b1
        full_spec((F, E)), full_spec((1, E)),                 # W2, b2
    ]
    out_specs = [pl.BlockSpec((block_b, S, E), lambda b: (b, 0, 0))]
    out_shape = [jax.ShapeDtypeStruct((B, S, E), jnp.float32)]
    if need_weights:
        out_specs.append(pl.BlockSpec((block_b, S, S), lambda b: (b, 0, 0)))
        out_shape.append(jax.ShapeDtypeStruct((B, S, S), jnp.float32))

    # Scheduler hints (rough roofline) + explicit VMEM budget.
    wbytes = int((wqkv_c.size + wo_c.size + w1_c.size + w2_c.size)
                 * jnp.dtype(wdt).itemsize)
    flops = int(2 * B * S * (3 * E * E + 2 * S * E + E * E + 2 * E * F))
    bytes_accessed = int(4 * (x.size + B * S * E
                              + (B * S * S if need_weights else 0)) + wbytes)
    cost = pl.CostEstimate(flops=flops,
                           transcendentals=int(B * num_heads * S * S),
                           bytes_accessed=bytes_accessed)

    act_bytes = block_b * S * (E + S) * 4
    vmem_est = (2 * wbytes + 4 * act_bytes
                + 16 * block_b * S * max(3 * E, F) * 4 + (8 << 20))
    # Clamp so the request also fits v7x's 64 MiB physical VMEM per TensorCore.
    vmem_limit = int(min(max(vmem_est, 32 << 20), 64 << 20))

    kernel = functools.partial(
        transformer_layer_kernel,
        num_heads=num_heads, need_weights=need_weights, compute_dtype=compute_dtype)

    outs = pl.pallas_call(
        kernel,
        out_shape=tuple(out_shape),
        grid_spec=pltpu.PrefetchScalarGridSpec(
            num_scalar_prefetch=0,
            grid=(grid_b,),
            in_specs=in_specs,
            out_specs=tuple(out_specs),
        ),
        compiler_params=pltpu.CompilerParams(
            dimension_semantics=("parallel",),
            vmem_limit_bytes=vmem_limit,
        ),
        cost_estimate=cost,
    )(
        x,
        params["ln1_w"], params["ln1_b"],
        wqkv_c, bqkv,
        wo_c, params["bo"],
        params["ln2_w"], params["ln2_b"],
        w1_c, params["b1"],
        w2_c, params["b2"],
    )
    if need_weights:
        return outs[0], outs[1]
    return outs[0], None


def init_params(key, embed_dim, ff_dim):
    ks = jax.random.split(key, 8)

    def lin(k, fan_in, shape):
        bound = 1.0 / math.sqrt(fan_in)
        return jax.random.uniform(k, shape, jnp.float32, -bound, bound)

    E, F = embed_dim, ff_dim
    return {
        # layer norms
        "ln1_w": jnp.ones((1, E), jnp.float32),
        "ln1_b": jnp.zeros((1, E), jnp.float32),
        "ln2_w": jnp.ones((1, E), jnp.float32),
        "ln2_b": jnp.zeros((1, E), jnp.float32),
        # attention in-projection (pre-transposed to (in, out)) + biases
        "wq": lin(ks[0], E, (E, E)),
        "wk": lin(ks[1], E, (E, E)),
        "wv": lin(ks[2], E, (E, E)),
        "bq": jnp.zeros((1, E), jnp.float32),
        "bk": jnp.zeros((1, E), jnp.float32),
        "bv": jnp.zeros((1, E), jnp.float32),
        # attention out-projection
        "wo": lin(ks[3], E, (E, E)),
        "bo": lin(ks[4], E, (1, E)),
        # feed-forward
        "w1": lin(ks[5], E, (E, F)),
        "b1": lin(ks[6], E, (1, F)),
        "w2": lin(ks[7], F, (F, E)),
        "b2": jnp.zeros((1, E), jnp.float32),
    }


def _reference(x, params, num_heads):
    """Pure-JAX reference (eval-mode PyTorch semantics) for correctness check."""
    B, S, E = x.shape
    H = num_heads
    Dh = E // H

    def ln(a, w, b):
        m = a.mean(-1, keepdims=True)
        v = ((a - m) ** 2).mean(-1, keepdims=True)
        return (a - m) / jnp.sqrt(v + EPS) * w + b

    xn = ln(x, params["ln1_w"][0], params["ln1_b"][0])
    q = xn @ params["wq"] + params["bq"][0]
    k = xn @ params["wk"] + params["bk"][0]
    v = xn @ params["wv"] + params["bv"][0]

    def split(a):  # (B,S,E) -> (B,H,S,Dh)
        return a.reshape(B, S, H, Dh).transpose(0, 2, 1, 3)

    qh, kh, vh = split(q), split(k), split(v)
    s = jnp.einsum("bhqd,bhkd->bhqk", qh, kh) / math.sqrt(Dh)
    p = jax.nn.softmax(s, axis=-1)
    ctx = jnp.einsum("bhqk,bhkd->bhqd", p, vh)
    ctx = ctx.transpose(0, 2, 1, 3).reshape(B, S, E)
    attn_out = ctx @ params["wo"] + params["bo"][0]
    x1 = x + attn_out
    xn2 = ln(x1, params["ln2_w"][0], params["ln2_b"][0])
    ff = jnp.maximum(xn2 @ params["w1"] + params["b1"][0], 0.0) @ params["w2"] \
        + params["b2"][0]
    return x1 + ff, p.mean(axis=1)


if __name__ == "__main__":
    B, S, E, H, FF = 2, 8, 32, 4, 64
    key = jax.random.PRNGKey(0)
    k_x, k_p = jax.random.split(key)
    x = jax.random.normal(k_x, (B, S, E), jnp.float32)
    params = init_params(k_p, E, FF)

    # compute_dtype=jnp.bfloat16 is available for v6e/v7x MXU; default keeps f32 semantics.
    out, attn_weights = simple_transformer_layer(x, params, num_heads=H,
                                                 need_weights=True)
    jax.block_until_ready((out, attn_weights))
    assert out.shape == (B, S, E) and attn_weights.shape == (B, S, S)

    ref_out, ref_attn = _reference(x, params, H)
    assert jnp.allclose(out, ref_out, atol=2e-2, rtol=2e-2), "output mismatch"
    assert jnp.allclose(attn_weights, ref_attn, atol=2e-2, rtol=2e-2), "attn mismatch"
    print("KERNEL_OK")
</pallas_src>

<mosaic_0001>
module attributes {stable_mosaic.version = 11 : i64} {
  func.func @transformer_layer_kernel(%arg0: i32, %arg1: memref<1x8x32xf32, #tpu.memory_space<vmem>>, %arg2: memref<1x32xf32, #tpu.memory_space<vmem>>, %arg3: memref<1x32xf32, #tpu.memory_space<vmem>>, %arg4: memref<32x96xf32, #tpu.memory_space<vmem>>, %arg5: memref<1x96xf32, #tpu.memory_space<vmem>>, %arg6: memref<32x32xf32, #tpu.memory_space<vmem>>, %arg7: memref<1x32xf32, #tpu.memory_space<vmem>>, %arg8: memref<1x32xf32, #tpu.memory_space<vmem>>, %arg9: memref<1x32xf32, #tpu.memory_space<vmem>>, %arg10: memref<32x64xf32, #tpu.memory_space<vmem>>, %arg11: memref<1x64xf32, #tpu.memory_space<vmem>>, %arg12: memref<64x32xf32, #tpu.memory_space<vmem>>, %arg13: memref<1x32xf32, #tpu.memory_space<vmem>>, %arg14: memref<1x8x32xf32, #tpu.memory_space<vmem>>, %arg15: memref<1x8x8xf32, #tpu.memory_space<vmem>>) attributes {dimension_semantics = [#tpu.dimension_semantics<parallel>], iteration_bounds = array<i64: 2>, scalar_prefetch = 0 : i64, scratch_operands = 0 : i64, tpu.core_type = #tpu.core_type<tc>, window_params = [{transform_indices = @transform_0, window_bounds = array<i64: 1, 8, 32>}, {pipeline_mode = #tpu.pipeline_mode<synchronous>, transform_indices = @transform_1, window_bounds = array<i64: 1, 32>}, {pipeline_mode = #tpu.pipeline_mode<synchronous>, transform_indices = @transform_2, window_bounds = array<i64: 1, 32>}, {pipeline_mode = #tpu.pipeline_mode<synchronous>, transform_indices = @transform_3, window_bounds = array<i64: 32, 96>}, {pipeline_mode = #tpu.pipeline_mode<synchronous>, transform_indices = @transform_4, window_bounds = array<i64: 1, 96>}, {pipeline_mode = #tpu.pipeline_mode<synchronous>, transform_indices = @transform_5, window_bounds = array<i64: 32, 32>}, {pipeline_mode = #tpu.pipeline_mode<synchronous>, transform_indices = @transform_6, window_bounds = array<i64: 1, 32>}, {pipeline_mode = #tpu.pipeline_mode<synchronous>, transform_indices = @transform_7, window_bounds = array<i64: 1, 32>}, {pipeline_mode = #tpu.pipeline_mode<synchronous>, transform_indices = @transform_8, window_bounds = array<i64: 1, 32>}, {pipeline_mode = #tpu.pipeline_mode<synchronous>, transform_indices = @transform_9, window_bounds = array<i64: 32, 64>}, {pipeline_mode = #tpu.pipeline_mode<synchronous>, transform_indices = @transform_10, window_bounds = array<i64: 1, 64>}, {pipeline_mode = #tpu.pipeline_mode<synchronous>, transform_indices = @transform_11, window_bounds = array<i64: 64, 32>}, {pipeline_mode = #tpu.pipeline_mode<synchronous>, transform_indices = @transform_12, window_bounds = array<i64: 1, 32>}, {transform_indices = @transform_13, window_bounds = array<i64: 1, 8, 32>}, {transform_indices = @transform_14, window_bounds = array<i64: 1, 8, 8>}]} {
    %c0 = arith.constant 0 : index
    %c0_0 = arith.constant 0 : index
    %c0_1 = arith.constant 0 : index
    %0 = vector.load %arg1[%c0, %c0_0, %c0_1] : memref<1x8x32xf32, #tpu.memory_space<vmem>>, vector<1x8x32xf32>
    %1 = vector.shape_cast %0 : vector<1x8x32xf32> to vector<8x32xf32>
    %c0_2 = arith.constant 0 : index
    %c0_3 = arith.constant 0 : index
    %2 = vector.load %arg2[%c0_2, %c0_3] : memref<1x32xf32, #tpu.memory_space<vmem>>, vector<1x32xf32>
    %3 = vector.shape_cast %2 : vector<1x32xf32> to vector<32xf32>
    %c0_4 = arith.constant 0 : index
    %c0_5 = arith.constant 0 : index
    %4 = vector.load %arg3[%c0_4, %c0_5] : memref<1x32xf32, #tpu.memory_space<vmem>>, vector<1x32xf32>
    %5 = vector.shape_cast %4 : vector<1x32xf32> to vector<32xf32>
    %cst = arith.constant dense<0.000000e+00> : vector<8xf32>
    %6 = vector.multi_reduction <add>, %1, %cst [1] : vector<8x32xf32> to vector<8xf32>
    %7 = vector.shape_cast %6 : vector<8xf32> to vector<8x1xf32>
    %cst_6 = arith.constant 3.200000e+01 : f32
    %8 = vector.broadcast %cst_6 : f32 to vector<8x1xf32>
    %9 = arith.divf %7, %8 : vector<8x1xf32>
    %10 = vector.broadcast %9 : vector<8x1xf32> to vector<8x32xf32>
    %11 = arith.subf %1, %10 : vector<8x32xf32>
    %12 = arith.mulf %11, %11 : vector<8x32xf32>
    %cst_7 = arith.constant dense<0.000000e+00> : vector<8xf32>
    %13 = vector.multi_reduction <add>, %12, %cst_7 [1] : vector<8x32xf32> to vector<8xf32>
    %14 = vector.shape_cast %13 : vector<8xf32> to vector<8x1xf32>
    %cst_8 = arith.constant 3.200000e+01 : f32
    %15 = vector.broadcast %cst_8 : f32 to vector<8x1xf32>
    %16 = arith.divf %14, %15 : vector<8x1xf32>
    %17 = vector.broadcast %9 : vector<8x1xf32> to vector<8x32xf32>
    %18 = arith.subf %1, %17 : vector<8x32xf32>
    %cst_9 = arith.constant 9.99999974E-6 : f32
    %19 = vector.broadcast %cst_9 : f32 to vector<8x1xf32>
    %20 = arith.addf %16, %19 : vector<8x1xf32>
    %21 = math.rsqrt %20 : vector<8x1xf32>
    %22 = vector.broadcast %21 : vector<8x1xf32> to vector<8x32xf32>
    %23 = arith.mulf %18, %22 : vector<8x32xf32>
    %24 = vector.shape_cast %3 : vector<32xf32> to vector<1x32xf32>
    %25 = vector.broadcast %24 : vector<1x32xf32> to vector<8x32xf32>
    %26 = arith.mulf %23, %25 : vector<8x32xf32>
    %27 = vector.shape_cast %5 : vector<32xf32> to vector<1x32xf32>
    %28 = vector.broadcast %27 : vector<1x32xf32> to vector<8x32xf32>
    %29 = arith.addf %26, %28 : vector<8x32xf32>
    %c0_10 = arith.constant 0 : index
    %c0_11 = arith.constant 0 : index
    %30 = vector.load %arg4[%c0_10, %c0_11] : memref<32x96xf32, #tpu.memory_space<vmem>>, vector<32x96xf32>
    %cst_12 = arith.constant dense<0.000000e+00> : vector<8x96xf32>
    %31 = tpu.matmul %29, %30, %cst_12 {dimension_numbers = #tpu.dot_dimension_numbers<[1], [0], [0], [1], [0, 0, 1, 1], [], []>} : vector<8x32xf32>, vector<32x96xf32>, vector<8x96xf32> -> vector<8x96xf32>
    %c0_13 = arith.constant 0 : index
    %c0_14 = arith.constant 0 : index
    %32 = vector.load %arg5[%c0_13, %c0_14] : memref<1x96xf32, #tpu.memory_space<vmem>>, vector<1x96xf32>
    %33 = vector.shape_cast %32 : vector<1x96xf32> to vector<96xf32>
    %34 = vector.shape_cast %33 : vector<96xf32> to vector<1x96xf32>
    %35 = vector.broadcast %34 : vector<1x96xf32> to vector<8x96xf32>
    %36 = arith.addf %31, %35 : vector<8x96xf32>
    %37 = vector.extract_strided_slice %36 {offsets = [0, 0], sizes = [8, 32], strides = [1, 1]} : vector<8x96xf32> to vector<8x32xf32>
    %cst_15 = arith.constant 0.353553385 : f32
    %38 = vector.broadcast %cst_15 : f32 to vector<8x32xf32>
    %39 = arith.mulf %37, %38 : vector<8x32xf32>
    %40 = vector.extract_strided_slice %36 {offsets = [0, 32], sizes = [8, 32], strides = [1, 1]} : vector<8x96xf32> to vector<8x32xf32>
    %41 = vector.extract_strided_slice %36 {offsets = [0, 64], sizes = [8, 32], strides = [1, 1]} : vector<8x96xf32> to vector<8x32xf32>
    %42 = vector.extract_strided_slice %39 {offsets = [0, 0], sizes = [8, 8], strides = [1, 1]} : vector<8x32xf32> to vector<8x8xf32>
    %43 = vector.shape_cast %42 : vector<8x8xf32> to vector<1x8x8xf32>
    %44 = vector.extract_strided_slice %39 {offsets = [0, 8], sizes = [8, 8], strides = [1, 1]} : vector<8x32xf32> to vector<8x8xf32>
    %45 = vector.shape_cast %44 : vector<8x8xf32> to vector<1x8x8xf32>
    %46 = vector.extract_strided_slice %39 {offsets = [0, 16], sizes = [8, 8], strides = [1, 1]} : vector<8x32xf32> to vector<8x8xf32>
    %47 = vector.shape_cast %46 : vector<8x8xf32> to vector<1x8x8xf32>
    %48 = vector.extract_strided_slice %39 {offsets = [0, 24], sizes = [8, 8], strides = [1, 1]} : vector<8x32xf32> to vector<8x8xf32>
    %49 = vector.shape_cast %48 : vector<8x8xf32> to vector<1x8x8xf32>
    %50 = tpu.concatenate %43, %45, %47, %49 in 0 : vector<1x8x8xf32>, vector<1x8x8xf32>, vector<1x8x8xf32>, vector<1x8x8xf32> -> vector<4x8x8xf32>
    %51 = vector.extract_strided_slice %40 {offsets = [0, 0], sizes = [8, 8], strides = [1, 1]} : vector<8x32xf32> to vector<8x8xf32>
    %52 = vector.shape_cast %51 : vector<8x8xf32> to vector<1x8x8xf32>
    %53 = vector.extract_strided_slice %40 {offsets = [0, 8], sizes = [8, 8], strides = [1, 1]} : vector<8x32xf32> to vector<8x8xf32>
    %54 = vector.shape_cast %53 : vector<8x8xf32> to vector<1x8x8xf32>
    %55 = vector.extract_strided_slice %40 {offsets = [0, 16], sizes = [8, 8], strides = [1, 1]} : vector<8x32xf32> to vector<8x8xf32>
    %56 = vector.shape_cast %55 : vector<8x8xf32> to vector<1x8x8xf32>
    %57 = vector.extract_strided_slice %40 {offsets = [0, 24], sizes = [8, 8], strides = [1, 1]} : vector<8x32xf32> to vector<8x8xf32>
    %58 = vector.shape_cast %57 : vector<8x8xf32> to vector<1x8x8xf32>
    %59 = tpu.concatenate %52, %54, %56, %58 in 0 : vector<1x8x8xf32>, vector<1x8x8xf32>, vector<1x8x8xf32>, vector<1x8x8xf32> -> vector<4x8x8xf32>
    %60 = vector.extract_strided_slice %41 {offsets = [0, 0], sizes = [8, 8], strides = [1, 1]} : vector<8x32xf32> to vector<8x8xf32>
    %61 = vector.shape_cast %60 : vector<8x8xf32> to vector<1x8x8xf32>
    %62 = vector.extract_strided_slice %41 {offsets = [0, 8], sizes = [8, 8], strides = [1, 1]} : vector<8x32xf32> to vector<8x8xf32>
    %63 = vector.shape_cast %62 : vector<8x8xf32> to vector<1x8x8xf32>
    %64 = vector.extract_strided_slice %41 {offsets = [0, 16], sizes = [8, 8], strides = [1, 1]} : vector<8x32xf32> to vector<8x8xf32>
    %65 = vector.shape_cast %64 : vector<8x8xf32> to vector<1x8x8xf32>
    %66 = vector.extract_strided_slice %41 {offsets = [0, 24], sizes = [8, 8], strides = [1, 1]} : vector<8x32xf32> to vector<8x8xf32>
    %67 = vector.shape_cast %66 : vector<8x8xf32> to vector<1x8x8xf32>
    %68 = tpu.concatenate %61, %63, %65, %67 in 0 : vector<1x8x8xf32>, vector<1x8x8xf32>, vector<1x8x8xf32>, vector<1x8x8xf32> -> vector<4x8x8xf32>
    "tpu.trace_start"() <{level = 10 : i32, message = "nqd,nkd->nqk"}> : () -> ()
    %cst_16 = arith.constant dense<0.000000e+00> : vector<4x8x8xf32>
    %69 = tpu.matmul %50, %59, %cst_16 {dimension_numbers = #tpu.dot_dimension_numbers<[2], [2], [1], [1], [0, 0, 0, 1, 1, 1], [0], [0]>} : vector<4x8x8xf32>, vector<4x8x8xf32>, vector<4x8x8xf32> -> vector<4x8x8xf32>
    "tpu.trace_stop"() : () -> ()
    %cst_17 = arith.constant dense<0xFF800000> : vector<4x8xf32>
    %70 = vector.multi_reduction <maximumf>, %69, %cst_17 [2] : vector<4x8x8xf32> to vector<4x8xf32>
    %71 = vector.shape_cast %70 : vector<4x8xf32> to vector<4x8x1xf32>
    %72 = vector.broadcast %71 : vector<4x8x1xf32> to vector<4x8x8xf32>
    %73 = arith.subf %69, %72 : vector<4x8x8xf32>
    %74 = math.exp %73 : vector<4x8x8xf32>
    %cst_18 = arith.constant dense<0.000000e+00> : vector<4x8xf32>
    %75 = vector.multi_reduction <add>, %74, %cst_18 [2] : vector<4x8x8xf32> to vector<4x8xf32>
    %76 = vector.shape_cast %75 : vector<4x8xf32> to vector<4x8x1xf32>
    %77 = tpu.reciprocal %76 {approx = true} : vector<4x8x1xf32> -> vector<4x8x1xf32>
    %78 = vector.broadcast %77 : vector<4x8x1xf32> to vector<4x8x8xf32>
    %79 = arith.mulf %74, %78 : vector<4x8x8xf32>
    "tpu.trace_start"() <{level = 10 : i32, message = "nqk,nkd->nqd"}> : () -> ()
    %cst_19 = arith.constant dense<0.000000e+00> : vector<4x8x8xf32>
    %80 = tpu.matmul %79, %68, %cst_19 {dimension_numbers = #tpu.dot_dimension_numbers<[2], [1], [1], [2], [0, 0, 0, 1, 1, 2], [0], [0]>} : vector<4x8x8xf32>, vector<4x8x8xf32>, vector<4x8x8xf32> -> vector<4x8x8xf32>
    "tpu.trace_stop"() : () -> ()
    %c0_20 = arith.constant 0 : index
    %c0_21 = arith.constant 0 : index
    %81 = vector.load %arg6[%c0_20, %c0_21] : memref<32x32xf32, #tpu.memory_space<vmem>>, vector<32x32xf32>
    %cst_22 = arith.constant 0.000000e+00 : f32
    %82 = vector.broadcast %cst_22 : f32 to vector<8x32xf32>
    %c0_23 = arith.constant 0 : index
    %c0_24 = arith.constant 0 : index
    %83 = vector.load %arg7[%c0_23, %c0_24] : memref<1x32xf32, #tpu.memory_space<vmem>>, vector<1x32xf32>
    %84 = vector.shape_cast %83 : vector<1x32xf32> to vector<32xf32>
    %85 = vector.shape_cast %84 : vector<32xf32> to vector<1x32xf32>
    %86 = vector.broadcast %85 : vector<1x32xf32> to vector<8x32xf32>
    %87 = arith.addf %82, %86 : vector<8x32xf32>
    %88 = vector.extract_strided_slice %80 {offsets = [0, 0, 0], sizes = [1, 8, 8], strides = [1, 1, 1]} : vector<4x8x8xf32> to vector<1x8x8xf32>
    %89 = vector.shape_cast %88 : vector<1x8x8xf32> to vector<8x8xf32>
    %90 = vector.extract_strided_slice %81 {offsets = [0, 0], sizes = [8, 32], strides = [1, 1]} : vector<32x32xf32> to vector<8x32xf32>
    %cst_25 = arith.constant dense<0.000000e+00> : vector<8x32xf32>
    %91 = tpu.matmul %89, %90, %cst_25 {dimension_numbers = #tpu.dot_dimension_numbers<[1], [0], [0], [1], [0, 0, 1, 1], [], []>} : vector<8x8xf32>, vector<8x32xf32>, vector<8x32xf32> -> vector<8x32xf32>
    %92 = arith.addf %87, %91 : vector<8x32xf32>
    %93 = vector.extract_strided_slice %80 {offsets = [1, 0, 0], sizes = [1, 8, 8], strides = [1, 1, 1]} : vector<4x8x8xf32> to vector<1x8x8xf32>
    %94 = vector.shape_cast %93 : vector<1x8x8xf32> to vector<8x8xf32>
    %95 = vector.extract_strided_slice %81 {offsets = [8, 0], sizes = [8, 32], strides = [1, 1]} : vector<32x32xf32> to vector<8x32xf32>
    %cst_26 = arith.constant dense<0.000000e+00> : vector<8x32xf32>
    %96 = tpu.matmul %94, %95, %cst_26 {dimension_numbers = #tpu.dot_dimension_numbers<[1], [0], [0], [1], [0, 0, 1, 1], [], []>} : vector<8x8xf32>, vector<8x32xf32>, vector<8x32xf32> -> vector<8x32xf32>
    %97 = arith.addf %92, %96 : vector<8x32xf32>
    %98 = vector.extract_strided_slice %80 {offsets = [2, 0, 0], sizes = [1, 8, 8], strides = [1, 1, 1]} : vector<4x8x8xf32> to vector<1x8x8xf32>
    %99 = vector.shape_cast %98 : vector<1x8x8xf32> to vector<8x8xf32>
    %100 = vector.extract_strided_slice %81 {offsets = [16, 0], sizes = [8, 32], strides = [1, 1]} : vector<32x32xf32> to vector<8x32xf32>
    %cst_27 = arith.constant dense<0.000000e+00> : vector<8x32xf32>
    %101 = tpu.matmul %99, %100, %cst_27 {dimension_numbers = #tpu.dot_dimension_numbers<[1], [0], [0], [1], [0, 0, 1, 1], [], []>} : vector<8x8xf32>, vector<8x32xf32>, vector<8x32xf32> -> vector<8x32xf32>
    %102 = arith.addf %97, %101 : vector<8x32xf32>
    %103 = vector.extract_strided_slice %80 {offsets = [3, 0, 0], sizes = [1, 8, 8], strides = [1, 1, 1]} : vector<4x8x8xf32> to vector<1x8x8xf32>
    %104 = vector.shape_cast %103 : vector<1x8x8xf32> to vector<8x8xf32>
    %105 = vector.extract_strided_slice %81 {offsets = [24, 0], sizes = [8, 32], strides = [1, 1]} : vector<32x32xf32> to vector<8x32xf32>
    %cst_28 = arith.constant dense<0.000000e+00> : vector<8x32xf32>
    %106 = tpu.matmul %104, %105, %cst_28 {dimension_numbers = #tpu.dot_dimension_numbers<[1], [0], [0], [1], [0, 0, 1, 1], [], []>} : vector<8x8xf32>, vector<8x32xf32>, vector<8x32xf32> -> vector<8x32xf32>
    %107 = arith.addf %102, %106 : vector<8x32xf32>
    %108 = arith.addf %1, %107 : vector<8x32xf32>
    %c0_29 = arith.constant 0 : index
    %c0_30 = arith.constant 0 : index
    %109 = vector.load %arg8[%c0_29, %c0_30] : memref<1x32xf32, #tpu.memory_space<vmem>>, vector<1x32xf32>
    %110 = vector.shape_cast %109 : vector<1x32xf32> to vector<32xf32>
    %c0_31 = arith.constant 0 : index
    %c0_32 = arith.constant 0 : index
    %111 = vector.load %arg9[%c0_31, %c0_32] : memref<1x32xf32, #tpu.memory_space<vmem>>, vector<1x32xf32>
    %112 = vector.shape_cast %111 : vector<1x32xf32> to vector<32xf32>
    %cst_33 = arith.constant dense<0.000000e+00> : vector<8xf32>
    %113 = vector.multi_reduction <add>, %108, %cst_33 [1] : vector<8x32xf32> to vector<8xf32>
    %114 = vector.shape_cast %113 : vector<8xf32> to vector<8x1xf32>
    %cst_34 = arith.constant 3.200000e+01 : f32
    %115 = vector.broadcast %cst_34 : f32 to vector<8x1xf32>
    %116 = arith.divf %114, %115 : vector<8x1xf32>
    %117 = vector.broadcast %116 : vector<8x1xf32> to vector<8x32xf32>
    %118 = arith.subf %108, %117 : vector<8x32xf32>
    %119 = arith.mulf %118, %118 : vector<8x32xf32>
    %cst_35 = arith.constant dense<0.000000e+00> : vector<8xf32>
    %120 = vector.multi_reduction <add>, %119, %cst_35 [1] : vector<8x32xf32> to vector<8xf32>
    %121 = vector.shape_cast %120 : vector<8xf32> to vector<8x1xf32>
    %cst_36 = arith.constant 3.200000e+01 : f32
    %122 = vector.broadcast %cst_36 : f32 to vector<8x1xf32>
    %123 = arith.divf %121, %122 : vector<8x1xf32>
    %124 = vector.broadcast %116 : vector<8x1xf32> to vector<8x32xf32>
    %125 = arith.subf %108, %124 : vector<8x32xf32>
    %cst_37 = arith.constant 9.99999974E-6 : f32
    %126 = vector.broadcast %cst_37 : f32 to vector<8x1xf32>
    %127 = arith.addf %123, %126 : vector<8x1xf32>
    %128 = math.rsqrt %127 : vector<8x1xf32>
    %129 = vector.broadcast %128 : vector<8x1xf32> to vector<8x32xf32>
    %130 = arith.mulf %125, %129 : vector<8x32xf32>
    %131 = vector.shape_cast %110 : vector<32xf32> to vector<1x32xf32>
    %132 = vector.broadcast %131 : vector<1x32xf32> to vector<8x32xf32>
    %133 = arith.mulf %130, %132 : vector<8x32xf32>
    %134 = vector.shape_cast %112 : vector<32xf32> to vector<1x32xf32>
    %135 = vector.broadcast %134 : vector<1x32xf32> to vector<8x32xf32>
    %136 = arith.addf %133, %135 : vector<8x32xf32>
    %c0_38 = arith.constant 0 : index
    %c0_39 = arith.constant 0 : index
    %137 = vector.load %arg10[%c0_38, %c0_39] : memref<32x64xf32, #tpu.memory_space<vmem>>, vector<32x64xf32>
    %cst_40 = arith.constant dense<0.000000e+00> : vector<8x64xf32>
    %138 = tpu.matmul %136, %137, %cst_40 {dimension_numbers = #tpu.dot_dimension_numbers<[1], [0], [0], [1], [0, 0, 1, 1], [], []>} : vector<8x32xf32>, vector<32x64xf32>, vector<8x64xf32> -> vector<8x64xf32>
    %c0_41 = arith.constant 0 : index
    %c0_42 = arith.constant 0 : index
    %139 = vector.load %arg11[%c0_41, %c0_42] : memref<1x64xf32, #tpu.memory_space<vmem>>, vector<1x64xf32>
    %140 = vector.shape_cast %139 : vector<1x64xf32> to vector<64xf32>
    %141 = vector.shape_cast %140 : vector<64xf32> to vector<1x64xf32>
    %142 = vector.broadcast %141 : vector<1x64xf32> to vector<8x64xf32>
    %143 = arith.addf %138, %142 : vector<8x64xf32>
    %cst_43 = arith.constant 0.000000e+00 : f32
    %144 = vector.broadcast %cst_43 : f32 to vector<8x64xf32>
    %145 = arith.maximumf %143, %144 : vector<8x64xf32>
    %c0_44 = arith.constant 0 : index
    %c0_45 = arith.constant 0 : index
    %146 = vector.load %arg12[%c0_44, %c0_45] : memref<64x32xf32, #tpu.memory_space<vmem>>, vector<64x32xf32>
    %cst_46 = arith.constant dense<0.000000e+00> : vector<8x32xf32>
    %147 = tpu.matmul %145, %146, %cst_46 {dimension_numbers = #tpu.dot_dimension_numbers<[1], [0], [0], [1], [0, 0, 1, 1], [], []>} : vector<8x64xf32>, vector<64x32xf32>, vector<8x32xf32> -> vector<8x32xf32>
    %c0_47 = arith.constant 0 : index
    %c0_48 = arith.constant 0 : index
    %148 = vector.load %arg13[%c0_47, %c0_48] : memref<1x32xf32, #tpu.memory_space<vmem>>, vector<1x32xf32>
    %149 = vector.shape_cast %148 : vector<1x32xf32> to vector<32xf32>
    %150 = vector.shape_cast %149 : vector<32xf32> to vector<1x32xf32>
    %151 = vector.broadcast %150 : vector<1x32xf32> to vector<8x32xf32>
    %152 = arith.addf %147, %151 : vector<8x32xf32>
    %153 = arith.addf %108, %152 : vector<8x32xf32>
    %154 = vector.shape_cast %153 : vector<8x32xf32> to vector<1x8x32xf32>
    %c0_49 = arith.constant 0 : index
    %c0_50 = arith.constant 0 : index
    %c0_51 = arith.constant 0 : index
    %155 = vector.load %arg14[%c0_49, %c0_50, %c0_51] : memref<1x8x32xf32, #tpu.memory_space<vmem>>, vector<1x8x32xf32>
    tpu.vector_store %arg14[%c0_49, %c0_50, %c0_51], %154 {strides = array<i32>} : memref<1x8x32xf32, #tpu.memory_space<vmem>>, vector<1x8x32xf32>,
    %156 = vector.shape_cast %79 : vector<4x8x8xf32> to vector<4x1x8x8xf32>
    %cst_52 = arith.constant dense<0.000000e+00> : vector<1x8x8xf32>
    %157 = vector.multi_reduction <add>, %156, %cst_52 [0] : vector<4x1x8x8xf32> to vector<1x8x8xf32>
    %cst_53 = arith.constant 4.000000e+00 : f32
    %158 = vector.broadcast %cst_53 : f32 to vector<1x8x8xf32>
    %159 = arith.divf %157, %158 : vector<1x8x8xf32>
    %c0_54 = arith.constant 0 : index
    %c0_55 = arith.constant 0 : index
    %c0_56 = arith.constant 0 : index
    %160 = vector.load %arg15[%c0_54, %c0_55, %c0_56] : memref<1x8x8xf32, #tpu.memory_space<vmem>>, vector<1x8x8xf32>
    tpu.vector_store %arg15[%c0_54, %c0_55, %c0_56], %159 {strides = array<i32>} : memref<1x8x8xf32, #tpu.memory_space<vmem>>, vector<1x8x8xf32>,
    return
  }
  func.func @transform_0(%arg0: i32) -> (i32, i32, i32) {
    %c0_i32 = arith.constant 0 : i32
    %c0_i32_0 = arith.constant 0 : i32
    %c0_i32_1 = arith.constant 0 : i32
    return %arg0, %c0_i32, %c0_i32_0 : i32, i32, i32
  }
  func.func @transform_1(%arg0: i32) -> (i32, i32) {
    %c0_i32 = arith.constant 0 : i32
    %c0_i32_0 = arith.constant 0 : i32
    %c0_i32_1 = arith.constant 0 : i32
    return %c0_i32, %c0_i32_0 : i32, i32
  }
  func.func @transform_2(%arg0: i32) -> (i32, i32) {
    %c0_i32 = arith.constant 0 : i32
    %c0_i32_0 = arith.constant 0 : i32
    %c0_i32_1 = arith.constant 0 : i32
    return %c0_i32, %c0_i32_0 : i32, i32
  }
  func.func @transform_3(%arg0: i32) -> (i32, i32) {
    %c0_i32 = arith.constant 0 : i32
    %c0_i32_0 = arith.constant 0 : i32
    %c0_i32_1 = arith.constant 0 : i32
    return %c0_i32, %c0_i32_0 : i32, i32
  }
  func.func @transform_4(%arg0: i32) -> (i32, i32) {
    %c0_i32 = arith.constant 0 : i32
    %c0_i32_0 = arith.constant 0 : i32
    %c0_i32_1 = arith.constant 0 : i32
    return %c0_i32, %c0_i32_0 : i32, i32
  }
  func.func @transform_5(%arg0: i32) -> (i32, i32) {
    %c0_i32 = arith.constant 0 : i32
    %c0_i32_0 = arith.constant 0 : i32
    %c0_i32_1 = arith.constant 0 : i32
    return %c0_i32, %c0_i32_0 : i32, i32
  }
  func.func @transform_6(%arg0: i32) -> (i32, i32) {
    %c0_i32 = arith.constant 0 : i32
    %c0_i32_0 = arith.constant 0 : i32
    %c0_i32_1 = arith.constant 0 : i32
    return %c0_i32, %c0_i32_0 : i32, i32
  }
  func.func @transform_7(%arg0: i32) -> (i32, i32) {
    %c0_i32 = arith.constant 0 : i32
    %c0_i32_0 = arith.constant 0 : i32
    %c0_i32_1 = arith.constant 0 : i32
    return %c0_i32, %c0_i32_0 : i32, i32
  }
  func.func @transform_8(%arg0: i32) -> (i32, i32) {
    %c0_i32 = arith.constant 0 : i32
    %c0_i32_0 = arith.constant 0 : i32
    %c0_i32_1 = arith.constant 0 : i32
    return %c0_i32, %c0_i32_0 : i32, i32
  }
  func.func @transform_9(%arg0: i32) -> (i32, i32) {
    %c0_i32 = arith.constant 0 : i32
    %c0_i32_0 = arith.constant 0 : i32
    %c0_i32_1 = arith.constant 0 : i32
    return %c0_i32, %c0_i32_0 : i32, i32
  }
  func.func @transform_10(%arg0: i32) -> (i32, i32) {
    %c0_i32 = arith.constant 0 : i32
    %c0_i32_0 = arith.constant 0 : i32
    %c0_i32_1 = arith.constant 0 : i32
    return %c0_i32, %c0_i32_0 : i32, i32
  }
  func.func @transform_11(%arg0: i32) -> (i32, i32) {
    %c0_i32 = arith.constant 0 : i32
    %c0_i32_0 = arith.constant 0 : i32
    %c0_i32_1 = arith.constant 0 : i32
    return %c0_i32, %c0_i32_0 : i32, i32
  }
  func.func @transform_12(%arg0: i32) -> (i32, i32) {
    %c0_i32 = arith.constant 0 : i32
    %c0_i32_0 = arith.constant 0 : i32
    %c0_i32_1 = arith.constant 0 : i32
    return %c0_i32, %c0_i32_0 : i32, i32
  }
  func.func @transform_13(%arg0: i32) -> (i32, i32, i32) {
    %c0_i32 = arith.constant 0 : i32
    %c0_i32_0 = arith.constant 0 : i32
    %c0_i32_1 = arith.constant 0 : i32
    return %arg0, %c0_i32, %c0_i32_0 : i32, i32, i32
  }
  func.func @transform_14(%arg0: i32) -> (i32, i32, i32) {
    %c0_i32 = arith.constant 0 : i32
    %c0_i32_0 = arith.constant 0 : i32
    %c0_i32_1 = arith.constant 0 : i32
    return %arg0, %c0_i32, %c0_i32_0 : i32, i32, i32
  }
}

</mosaic_0001>

<llo_original>
// kernel: tpu_custom_call.1
$region0: #{tpu_custom_call.1}
  #allocation0 [shape = 'u32[]', space=smem, size = 0x4, offset = 0x4, fixed_abs, tag = 'smem constant byte address 0x4 - core index']
  #allocation1 [shape = 'u32[144,128]{1,0:T(1,128)}', space=vmem, size = 0x12000, scoped, tag = 'internal scratch']
  %s0 = inlined_call_operand.hbm [shape: f32[2,8,32], index: 0, kind: input, shape index: {}]
  %s1 = inlined_call_operand.vmem [shape: f32[1,32], index: 1, kind: input, shape index: {}]
  %s2 = inlined_call_operand.vmem [shape: f32[1,32], index: 2, kind: input, shape index: {}]
  %s3 = inlined_call_operand.vmem [shape: f32[32,96], index: 3, kind: input, shape index: {}]
  %s4 = inlined_call_operand.vmem [shape: f32[1,96], index: 4, kind: input, shape index: {}]
  %s5 = inlined_call_operand.vmem [shape: f32[32,32], index: 5, kind: input, shape index: {}]
  %s6 = inlined_call_operand.vmem [shape: f32[1,32], index: 6, kind: input, shape index: {}]
  %s7 = inlined_call_operand.vmem [shape: f32[1,32], index: 7, kind: input, shape index: {}]
  %s8 = inlined_call_operand.vmem [shape: f32[1,32], index: 8, kind: input, shape index: {}]
  %s9 = inlined_call_operand.vmem [shape: f32[32,64], index: 9, kind: input, shape index: {}]
  %s10 = inlined_call_operand.vmem [shape: f32[1,64], index: 10, kind: input, shape index: {}]
  %s11 = inlined_call_operand.vmem [shape: f32[64,32], index: 11, kind: input, shape index: {}]
  %s12 = inlined_call_operand.vmem [shape: f32[1,32], index: 12, kind: input, shape index: {}]
  %s13 = inlined_call_operand.hbm [shape: f32[2,8,32], index: 13, kind: output, shape index: {0}]
  %s14 = inlined_call_operand.hbm [shape: f32[2,8,8], index: 14, kind: output, shape index: {1}]
  %15 = xla_tuple %s13, %s14
  %s16 = sld [smem:[#allocation0]]
  $region97: #{tpu_custom_call.1} parent=0
    _
  %s18 = ssub.s32 1, %s16
  %s19 = scalar_select 0, %s18, %s16
  $region1: #{tpu_custom_call.1} parent=0
    #allocation2 [shape = 'u8[8192]{0}', space=vmem, size = 0x2000, scoped, tag = 'input window, operand 0']
    #allocation3 [shape = 's32[2]{0}', space=sflag, size = 0x8, scoped, tag = 'scoped memory for tpu_custom_call.1']
    #allocation4 [shape = 's32[2]{0}', space=sflag, size = 0x8, scoped, tag = 'scoped memory for tpu_custom_call.1']
    #allocation5 [shape = 'u8[8192]{0}', space=vmem, size = 0x2000, scoped, tag = 'output window, operand 0']
    #allocation6 [shape = 'u8[8192]{0}', space=vmem, size = 0x2000, scoped, tag = 'output window, operand 1']
    #allocation7 [shape = 's32[2]{0}', space=sflag, size = 0x8, scoped, tag = 'scoped memory for tpu_custom_call.1']
    %20 = vsyncpa [#allocation3], 0
    %s21 = scalar_lea.sflag [#allocation3], 1
    %22 = vsyncpa %s21, 0
    %23 = vsyncpa [#allocation4], 0
    %s24 = scalar_lea.sflag [#allocation4], 1
    %25 = vsyncpa %s24, 0
    %26 = vsyncpa [#allocation7], 0
    %s27 = scalar_lea.sflag [#allocation7], 1
    %28 = vsyncpa %s27, 0
    loop: start=0, step=1, limit=4
    $region2: #{tpu_custom_call.1} parent=1 // loop_pre_header
      _
    $region3: #{tpu_custom_call.1} parent=1 // loop_header
      %s30 = sphi 0, %s34
      %p31 = scmp.ge.s32.totalorder %s30, 4
      %s40 = sphi 0, %s42
      %s43 = sphi 0, %s40
      %s44 = sphi 0, %s43
      %s60 = sphi 0, %s44
      %s64 = sphi 0, %s64
      %s66 = sphi 0, %s64
      %s67 = sphi 0, %s66
      %s81 = sphi 0, %s67
      %s85 = sphi 0, %s85
      %s87 = sphi 0, %s85
      %s88 = sphi 0, %s87
      %s102 = sphi 0, %s88
      %s106 = sphi 0, %s106
      %s108 = sphi 0, %s106
      %s109 = sphi 0, %s108
      %s123 = sphi 0, %s109
      %s127 = sphi 0, %s127
      %s129 = sphi 0, %s127
      %s130 = sphi 0, %s129
      %s144 = sphi 0, %s130
      %s148 = sphi 0, %s148
      %s150 = sphi 0, %s148
      %s151 = sphi 0, %s150
      %s165 = sphi 0, %s151
      %s169 = sphi 0, %s169
      %s171 = sphi 0, %s169
      %s172 = sphi 0, %s171
      %s186 = sphi 0, %s172
      %s190 = sphi 0, %s190
      %s192 = sphi 0, %s190
      %s193 = sphi 0, %s192
      %s207 = sphi 0, %s193
      %s211 = sphi 0, %s211
      %s213 = sphi 0, %s211
      %s214 = sphi 0, %s213
      %s228 = sphi 0, %s214
      %s232 = sphi 0, %s232
      %s234 = sphi 0, %s232
      %s235 = sphi 0, %s234
      %s249 = sphi 0, %s235
      %s253 = sphi 0, %s253
      %s255 = sphi 0, %s253
      %s256 = sphi 0, %s255
      %s270 = sphi 0, %s256
      %s274 = sphi 0, %s274
      %s276 = sphi 0, %s274
      %s277 = sphi 0, %s276
      %s291 = sphi 0, %s277
      %s295 = sphi 0, %s295
      %s297 = sphi 0, %s295
      %s298 = sphi 0, %s297
      %s312 = sphi 0, %s298
      %s318 = sphi 0, %s320
      %s321 = sphi 0, %s318
      %s322 = sphi 0, %s321
      %s338 = sphi 0, %s322
      %s344 = sphi 0, %s346
      %s347 = sphi 0, %s344
      %s348 = sphi 0, %s347
      %s364 = sphi 0, %s348
    $region4: #{tpu_custom_call.1} parent=1 // loop_header_branch
      %33 = sbr.rel (%p31) target = $region8
    $region5: #{tpu_custom_call.1} parent=1 // loop_body
      %s35 = ssub.s32 %s30, 1
      %s36 = ssub.s32 %s30, 2
      %s37 = sadd.s32 %s30, 1
      %s38 = ssub.s32 %s30, %s37
      %p39 = scmp.eq.s32.totalorder %s38, 0
      %s41 = sadd.s32 %s40, 1
      %s42 = scalar_select %p39, %s40, %s41
      %p45 = pneg %p39
      %p46 = scmp.eq.s32.totalorder %s30, 1
      %p47 = por %p45, %p46
      %p48 = scmp.ne.s32.totalorder %s40, %s43
      %p49 = scmp.eq.s32.totalorder %s30, 0
      %p50 = por %p48, %p49
      %p51 = scmp.ne.s32.totalorder %s40, %s43
      %p52 = scmp.eq.s32.totalorder %s35, 1
      %p53 = por %p51, %p52
      %p54 = scmp.ne.s32.totalorder %s43, %s44
      %p55 = scmp.eq.s32.totalorder %s35, 0
      %p56 = por %p54, %p55
      %p57 = scmp.ne.s32.totalorder %s43, %s44
      %p58 = scmp.eq.s32.totalorder %s36, 1
      %p59 = por %p57, %p58
      %p61 = scmp.ne.s32.totalorder %s44, %s60
      %p62 = scmp.eq.s32.totalorder %s36, 0
      %p63 = por %p61, %p62
      %s65 = sadd.s32 %s64, 1
      %p68 = scmp.eq.s32.totalorder %s30, 1
      %p69 = scmp.ne.s32.totalorder %s64, %s66
      %p70 = scmp.eq.s32.totalorder %s30, 0
      %p71 = por %p69, %p70
      %p72 = scmp.ne.s32.totalorder %s64, %s66
      %p73 = scmp.eq.s32.totalorder %s35, 1
      %p74 = por %p72, %p73
      %p75 = scmp.ne.s32.totalorder %s66, %s67
      %p76 = scmp.eq.s32.totalorder %s35, 0
      %p77 = por %p75, %p76
      %p78 = scmp.ne.s32.totalorder %s66, %s67
      %p79 = scmp.eq.s32.totalorder %s36, 1
      %p80 = por %p78, %p79
      %p82 = scmp.ne.s32.totalorder %s67, %s81
      %p83 = scmp.eq.s32.totalorder %s36, 0
      %p84 = por %p82, %p83
      %s86 = sadd.s32 %s85, 1
      %p89 = scmp.eq.s32.totalorder %s30, 1
      %p90 = scmp.ne.s32.totalorder %s85, %s87
      %p91 = scmp.eq.s32.totalorder %s30, 0
      %p92 = por %p90, %p91
      %p93 = scmp.ne.s32.totalorder %s85, %s87
      %p94 = scmp.eq.s32.totalorder %s35, 1
      %p95 = por %p93, %p94
      %p96 = scmp.ne.s32.totalorder %s87, %s88
      %p97 = scmp.eq.s32.totalorder %s35, 0
      %p98 = por %p96, %p97
      %p99 = scmp.ne.s32.totalorder %s87, %s88
      %p100 = scmp.eq.s32.totalorder %s36, 1
      %p101 = por %p99, %p100
      %p103 = scmp.ne.s32.totalorder %s88, %s102
      %p104 = scmp.eq.s32.totalorder %s36, 0
      %p105 = por %p103, %p104
      %s107 = sadd.s32 %s106, 1
      %p110 = scmp.eq.s32.totalorder %s30, 1
      %p111 = scmp.ne.s32.totalorder %s106, %s108
      %p112 = scmp.eq.s32.totalorder %s30, 0
      %p113 = por %p111, %p112
      %p114 = scmp.ne.s32.totalorder %s106, %s108
      %p115 = scmp.eq.s32.totalorder %s35, 1
      %p116 = por %p114, %p115
      %p117 = scmp.ne.s32.totalorder %s108, %s109
      %p118 = scmp.eq.s32.totalorder %s35, 0
      %p119 = por %p117, %p118
      %p120 = scmp.ne.s32.totalorder %s108, %s109
      %p121 = scmp.eq.s32.totalorder %s36, 1
      %p122 = por %p120, %p121
      %p124 = scmp.ne.s32.totalorder %s109, %s123
      %p125 = scmp.eq.s32.totalorder %s36, 0
      %p126 = por %p124, %p125
      %s128 = sadd.s32 %s127, 1
      %p131 = scmp.eq.s32.totalorder %s30, 1
      %p132 = scmp.ne.s32.totalorder %s127, %s129
      %p133 = scmp.eq.s32.totalorder %s30, 0
      %p134 = por %p132, %p133
      %p135 = scmp.ne.s32.totalorder %s127, %s129
      %p136 = scmp.eq.s32.totalorder %s35, 1
      %p137 = por %p135, %p136
      %p138 = scmp.ne.s32.totalorder %s129, %s130
      %p139 = scmp.eq.s32.totalorder %s35, 0
      %p140 = por %p138, %p139
      %p141 = scmp.ne.s32.totalorder %s129, %s130
      %p142 = scmp.eq.s32.totalorder %s36, 1
      %p143 = por %p141, %p142
      %p145 = scmp.ne.s32.totalorder %s130, %s144
      %p146 = scmp.eq.s32.totalorder %s36, 0
      %p147 = por %p145, %p146
      %s149 = sadd.s32 %s148, 1
      %p152 = scmp.eq.s32.totalorder %s30, 1
      %p153 = scmp.ne.s32.totalorder %s148, %s150
      %p154 = scmp.eq.s32.totalorder %s30, 0
      %p155 = por %p153, %p154
      %p156 = scmp.ne.s32.totalorder %s148, %s150
      %p157 = scmp.eq.s32.totalorder %s35, 1
      %p158 = por %p156, %p157
      %p159 = scmp.ne.s32.totalorder %s150, %s151
      %p160 = scmp.eq.s32.totalorder %s35, 0
      %p161 = por %p159, %p160
      %p162 = scmp.ne.s32.totalorder %s150, %s151
      %p163 = scmp.eq.s32.totalorder %s36, 1
      %p164 = por %p162, %p163
      %p166 = scmp.ne.s32.totalorder %s151, %s165
      %p167 = scmp.eq.s32.totalorder %s36, 0
      %p168 = por %p166, %p167
      %s170 = sadd.s32 %s169, 1
      %p173 = scmp.eq.s32.totalorder %s30, 1
      %p174 = scmp.ne.s32.totalorder %s169, %s171
      %p175 = scmp.eq.s32.totalorder %s30, 0
      %p176 = por %p174, %p175
      %p177 = scmp.ne.s32.totalorder %s169, %s171
      %p178 = scmp.eq.s32.totalorder %s35, 1
      %p179 = por %p177, %p178
      %p180 = scmp.ne.s32.totalorder %s171, %s172
      %p181 = scmp.eq.s32.totalorder %s35, 0
      %p182 = por %p180, %p181
      %p183 = scmp.ne.s32.totalorder %s171, %s172
      %p184 = scmp.eq.s32.totalorder %s36, 1
      %p185 = por %p183, %p184
      %p187 = scmp.ne.s32.totalorder %s172, %s186
      %p188 = scmp.eq.s32.totalorder %s36, 0
      %p189 = por %p187, %p188
      %s191 = sadd.s32 %s190, 1
      %p194 = scmp.eq.s32.totalorder %s30, 1
      %p195 = scmp.ne.s32.totalorder %s190, %s192
      %p196 = scmp.eq.s32.totalorder %s30, 0
      %p197 = por %p195, %p196
      %p198 = scmp.ne.s32.totalorder %s190, %s192
      %p199 = scmp.eq.s32.totalorder %s35, 1
      %p200 = por %p198, %p199
      %p201 = scmp.ne.s32.totalorder %s192, %s193
      %p202 = scmp.eq.s32.totalorder %s35, 0
      %p203 = por %p201, %p202
      %p204 = scmp.ne.s32.totalorder %s192, %s193
      %p205 = scmp.eq.s32.totalorder %s36, 1
      %p206 = por %p204, %p205
      %p208 = scmp.ne.s32.totalorder %s193, %s207
      %p209 = scmp.eq.s32.totalorder %s36, 0
      %p210 = por %p208, %p209
      %s212 = sadd.s32 %s211, 1
      %p215 = scmp.eq.s32.totalorder %s30, 1
      %p216 = scmp.ne.s32.totalorder %s211, %s213
      %p217 = scmp.eq.s32.totalorder %s30, 0
      %p218 = por %p216, %p217
      %p219 = scmp.ne.s32.totalorder %s211, %s213
      %p220 = scmp.eq.s32.totalorder %s35, 1
      %p221 = por %p219, %p220
      %p222 = scmp.ne.s32.totalorder %s213, %s214
      %p223 = scmp.eq.s32.totalorder %s35, 0
      %p224 = por %p222, %p223
      %p225 = scmp.ne.s32.totalorder %s213, %s214
      %p226 = scmp.eq.s32.totalorder %s36, 1
      %p227 = por %p225, %p226
      %p229 = scmp.ne.s32.totalorder %s214, %s228
      %p230 = scmp.eq.s32.totalorder %s36, 0
      %p231 = por %p229, %p230
      %s233 = sadd.s32 %s232, 1
      %p236 = scmp.eq.s32.totalorder %s30, 1
      %p237 = scmp.ne.s32.totalorder %s232, %s234
      %p238 = scmp.eq.s32.totalorder %s30, 0
      %p239 = por %p237, %p238
      %p240 = scmp.ne.s32.totalorder %s232, %s234
      %p241 = scmp.eq.s32.totalorder %s35, 1
      %p242 = por %p240, %p241
      %p243 = scmp.ne.s32.totalorder %s234, %s235
      %p244 = scmp.eq.s32.totalorder %s35, 0
      %p245 = por %p243, %p244
      %p246 = scmp.ne.s32.totalorder %s234, %s235
      %p247 = scmp.eq.s32.totalorder %s36, 1
      %p248 = por %p246, %p247
      %p250 = scmp.ne.s32.totalorder %s235, %s249
      %p251 = scmp.eq.s32.totalorder %s36, 0
      %p252 = por %p250, %p251
      %s254 = sadd.s32 %s253, 1
      %p257 = scmp.eq.s32.totalorder %s30, 1
      %p258 = scmp.ne.s32.totalorder %s253, %s255
      %p259 = scmp.eq.s32.totalorder %s30, 0
      %p260 = por %p258, %p259
      %p261 = scmp.ne.s32.totalorder %s253, %s255
      %p262 = scmp.eq.s32.totalorder %s35, 1
      %p263 = por %p261, %p262
      %p264 = scmp.ne.s32.totalorder %s255, %s256
      %p265 = scmp.eq.s32.totalorder %s35, 0
      %p266 = por %p264, %p265
      %p267 = scmp.ne.s32.totalorder %s255, %s256
      %p268 = scmp.eq.s32.totalorder %s36, 1
      %p269 = por %p267, %p268
      %p271 = scmp.ne.s32.totalorder %s256, %s270
      %p272 = scmp.eq.s32.totalorder %s36, 0
      %p273 = por %p271, %p272
      %s275 = sadd.s32 %s274, 1
      %p278 = scmp.eq.s32.totalorder %s30, 1
      %p279 = scmp.ne.s32.totalorder %s274, %s276
      %p280 = scmp.eq.s32.totalorder %s30, 0
      %p281 = por %p279, %p280
      %p282 = scmp.ne.s32.totalorder %s274, %s276
      %p283 = scmp.eq.s32.totalorder %s35, 1
      %p284 = por %p282, %p283
      %p285 = scmp.ne.s32.totalorder %s276, %s277
      %p286 = scmp.eq.s32.totalorder %s35, 0
      %p287 = por %p285, %p286
      %p288 = scmp.ne.s32.totalorder %s276, %s277
      %p289 = scmp.eq.s32.totalorder %s36, 1
      %p290 = por %p288, %p289
      %p292 = scmp.ne.s32.totalorder %s277, %s291
      %p293 = scmp.eq.s32.totalorder %s36, 0
      %p294 = por %p292, %p293
      %s296 = sadd.s32 %s295, 1
      %p299 = scmp.eq.s32.totalorder %s30, 1
      %p300 = scmp.ne.s32.totalorder %s295, %s297
      %p301 = scmp.eq.s32.totalorder %s30, 0
      %p302 = por %p300, %p301
      %p303 = scmp.ne.s32.totalorder %s295, %s297
      %p304 = scmp.eq.s32.totalorder %s35, 1
      %p305 = por %p303, %p304
      %p306 = scmp.ne.s32.totalorder %s297, %s298
      %p307 = scmp.eq.s32.totalorder %s35, 0
      %p308 = por %p306, %p307
      %p309 = scmp.ne.s32.totalorder %s297, %s298
      %p310 = scmp.eq.s32.totalorder %s36, 1
      %p311 = por %p309, %p310
      %p313 = scmp.ne.s32.totalorder %s298, %s312
      %p314 = scmp.eq.s32.totalorder %s36, 0
      %p315 = por %p313, %p314
      %s316 = ssub.s32 %s30, %s37
      %p317 = scmp.eq.s32.totalorder %s316, 0
      %s319 = sadd.s32 %s318, 1
      %s320 = scalar_select %p317, %s318, %s319
      %p323 = pneg %p317
      %p324 = scmp.eq.s32.totalorder %s30, 1
      %p325 = por %p323, %p324
      %p326 = scmp.ne.s32.totalorder %s318, %s321
      %p327 = scmp.eq.s32.totalorder %s30, 0
      %p328 = por %p326, %p327
      %p329 = scmp.ne.s32.totalorder %s318, %s321
      %p330 = scmp.eq.s32.totalorder %s35, 1
      %p331 = por %p329, %p330
      %p332 = scmp.ne.s32.totalorder %s321, %s322
      %p333 = scmp.eq.s32.totalorder %s35, 0
      %p334 = por %p332, %p333
      %p335 = scmp.ne.s32.totalorder %s321, %s322
      %p336 = scmp.eq.s32.totalorder %s36, 1
      %p337 = por %p335, %p336
      %p339 = scmp.ne.s32.totalorder %s322, %s338
      %p340 = scmp.eq.s32.totalorder %s36, 0
      %p341 = por %p339, %p340
      %s342 = ssub.s32 %s30, %s37
      %p343 = scmp.eq.s32.totalorder %s342, 0
      %s345 = sadd.s32 %s344, 1
      %s346 = scalar_select %p343, %s344, %s345
      %p349 = pneg %p343
      %p350 = scmp.eq.s32.totalorder %s30, 1
      %p351 = por %p349, %p350
      %p352 = scmp.ne.s32.totalorder %s344, %s347
      %p353 = scmp.eq.s32.totalorder %s30, 0
      %p354 = por %p352, %p353
      %p355 = scmp.ne.s32.totalorder %s344, %s347
      %p356 = scmp.eq.s32.totalorder %s35, 1
      %p357 = por %p355, %p356
      %p358 = scmp.ne.s32.totalorder %s347, %s348
      %p359 = scmp.eq.s32.totalorder %s35, 0
      %p360 = por %p358, %p359
      %p361 = scmp.ne.s32.totalorder %s347, %s348
      %p362 = scmp.eq.s32.totalorder %s36, 1
      %p363 = por %p361, %p362
      %p365 = scmp.ne.s32.totalorder %s348, %s364
      %p366 = scmp.eq.s32.totalorder %s36, 0
      %p367 = por %p365, %p366
      %p368 = scmp.le.s32.totalorder 1, %s30
      %p369 = scmp.lt.s32.totalorder %s30, 3
      %p370 = pnand %p368, %p369
      %p371 = pneg %p370
      // Predicated region
      $region9: #{tpu_custom_call.1} parent=5 // pred_check
        _
      $region10: #{tpu_custom_call.1} parent=5 // pred_check_branch
        %373 = sbr.rel (%p370) target = $region12
      $region11: #{tpu_custom_call.1} parent=5 // pred_region
        %s374 = ssub.s32 %s30, 1
        // Predicated region
        $region13: #{tpu_custom_call.1} parent=11 // pred_check
          %p375 = pneg %p77
        $region14: #{tpu_custom_call.1} parent=11 // pred_check_branch
          %377 = sbr.rel (%p375) target = $region16
        $region15: #{tpu_custom_call.1} parent=11 // pred_region
          _
        $region16: #{tpu_custom_call.1} parent=11 // pred_fallthru
          _
        // Predicated region
        $region17: #{tpu_custom_call.1} parent=11 // pred_check
          %p378 = pneg %p98
        $region18: #{tpu_custom_call.1} parent=11 // pred_check_branch
          %380 = sbr.rel (%p378) target = $region20
        $region19: #{tpu_custom_call.1} parent=11 // pred_region
          _
        $region20: #{tpu_custom_call.1} parent=11 // pred_fallthru
          _
        // Predicated region
        $region21: #{tpu_custom_call.1} parent=11 // pred_check
          %p381 = pneg %p119
        $region22: #{tpu_custom_call.1} parent=11 // pred_check_branch
          %383 = sbr.rel (%p381) target = $region24
        $region23: #{tpu_custom_call.1} parent=11 // pred_region
          _
        $region24: #{tpu_custom_call.1} parent=11 // pred_fallthru
          _
        // Predicated region
        $region25: #{tpu_custom_call.1} parent=11 // pred_check
          %p384 = pneg %p140
        $region26: #{tpu_custom_call.1} parent=11 // pred_check_branch
          %386 = sbr.rel (%p384) target = $region28
        $region27: #{tpu_custom_call.1} parent=11 // pred_region
          _
        $region28: #{tpu_custom_call.1} parent=11 // pred_fallthru
          _
        // Predicated region
        $region29: #{tpu_custom_call.1} parent=11 // pred_check
          %p387 = pneg %p161
        $region30: #{tpu_custom_call.1} parent=11 // pred_check_branch
          %389 = sbr.rel (%p387) target = $region32
        $region31: #{tpu_custom_call.1} parent=11 // pred_region
          _
        $region32: #{tpu_custom_call.1} parent=11 // pred_fallthru
          _
        // Predicated region
        $region33: #{tpu_custom_call.1} parent=11 // pred_check
          %p390 = pneg %p182
        $region34: #{tpu_custom_call.1} parent=11 // pred_check_branch
          %392 = sbr.rel (%p390) target = $region36
        $region35: #{tpu_custom_call.1} parent=11 // pred_region
          _
        $region36: #{tpu_custom_call.1} parent=11 // pred_fallthru
          _
        // Predicated region
        $region37: #{tpu_custom_call.1} parent=11 // pred_check
          %p393 = pneg %p203
        $region38: #{tpu_custom_call.1} parent=11 // pred_check_branch
          %395 = sbr.rel (%p393) target = $region40
        $region39: #{tpu_custom_call.1} parent=11 // pred_region
          _
        $region40: #{tpu_custom_call.1} parent=11 // pred_fallthru
          _
        // Predicated region
        $region41: #{tpu_custom_call.1} parent=11 // pred_check
          %p396 = pneg %p224
        $region42: #{tpu_custom_call.1} parent=11 // pred_check_branch
          %398 = sbr.rel (%p396) target = $region44
        $region43: #{tpu_custom_call.1} parent=11 // pred_region
          _
        $region44: #{tpu_custom_call.1} parent=11 // pred_fallthru
          _
        // Predicated region
        $region45: #{tpu_custom_call.1} parent=11 // pred_check
          %p399 = pneg %p245
        $region46: #{tpu_custom_call.1} parent=11 // pred_check_branch
          %401 = sbr.rel (%p399) target = $region48
        $region47: #{tpu_custom_call.1} parent=11 // pred_region
          _
        $region48: #{tpu_custom_call.1} parent=11 // pred_fallthru
          _
        // Predicated region
        $region49: #{tpu_custom_call.1} parent=11 // pred_check
          %p402 = pneg %p266
        $region50: #{tpu_custom_call.1} parent=11 // pred_check_branch
          %404 = sbr.rel (%p402) target = $region52
        $region51: #{tpu_custom_call.1} parent=11 // pred_region
          _
        $region52: #{tpu_custom_call.1} parent=11 // pred_fallthru
          _
        // Predicated region
        $region53: #{tpu_custom_call.1} parent=11 // pred_check
          %p405 = pneg %p287
        $region54: #{tpu_custom_call.1} parent=11 // pred_check_branch
          %407 = sbr.rel (%p405) target = $region56
        $region55: #{tpu_custom_call.1} parent=11 // pred_region
          _
        $region56: #{tpu_custom_call.1} parent=11 // pred_fallthru
          _
        // Predicated region
        $region57: #{tpu_custom_call.1} parent=11 // pred_check
          %p408 = pneg %p308
        $region58: #{tpu_custom_call.1} parent=11 // pred_check_branch
          %410 = sbr.rel (%p408) target = $region60
        $region59: #{tpu_custom_call.1} parent=11 // pred_region
          _
        $region60: #{tpu_custom_call.1} parent=11 // pred_fallthru
          _
      $region12: #{tpu_custom_call.1} parent=5 // pred_fallthru
        _
      %p411 = scmp.lt.s32.totalorder %s30, 2
      // Predicated region
      $region61: #{tpu_custom_call.1} parent=5 // pred_check
        %p412 = pneg %p411
      $region62: #{tpu_custom_call.1} parent=5 // pred_check_branch
        %414 = sbr.rel (%p412) target = $region64
      $region63: #{tpu_custom_call.1} parent=5 // pred_region
        // Predicated region
        $region65: #{tpu_custom_call.1} parent=63 // pred_check
          %p415 = pneg %p50
        $region66: #{tpu_custom_call.1} parent=63 // pred_check_branch
          %417 = sbr.rel (%p415) target = $region68
        $region67: #{tpu_custom_call.1} parent=63 // pred_region
          %s418 = sand.u32 %s40, 1
          %s419 = scalar_lea.sflag [#allocation3], %s418
          %s420 = sand.u32 %s40, 1
          %s421 = smul.addr %s420, 8
          %s422 = scalar_lea.vmem [#allocation2], %s421
          %s424 = ssub.s32 128, 128
          %425 = vsyncadd %s419, %s424
          %s426 = smul.addr %s30, 128
          %s427 = scalar_lea.hbm %s0, %s426
          %s429 = sshll.u32 %s422, 4
          %s430 = int_to_ptr.vmem [resolvable:$true] %s429
          %432 = dma.hbm_to_vmem [thread:$0]  %s427, 128, %s430, %s419
        $region68: #{tpu_custom_call.1} parent=63 // pred_fallthru
          _
      $region64: #{tpu_custom_call.1} parent=5 // pred_fallthru
        _
      %p433 = scmp.le.s32.totalorder 1, %s30
      %p434 = scmp.lt.s32.totalorder %s30, 3
      %p435 = pnand %p433, %p434
      %p436 = pneg %p435
      // Predicated region
      $region69: #{tpu_custom_call.1} parent=5 // pred_check
        _
      $region70: #{tpu_custom_call.1} parent=5 // pred_check_branch
        %438 = sbr.rel (%p435) target = $region72
      $region71: #{tpu_custom_call.1} parent=5 // pred_region
        %s439 = ssub.s32 %s30, 1
        %s440 = sand.u32 %s43, 1
        %s441 = scalar_lea.sflag [#allocation3], %s440
        %s442 = sand.u32 %s43, 1
        %s443 = smul.addr %s442, 8
        %s444 = scalar_lea.vmem [#allocation2], %s443
        // Predicated region
        $region73: #{tpu_custom_call.1} parent=71 // pred_check
          %p445 = pneg %p56
        $region74: #{tpu_custom_call.1} parent=71 // pred_check_branch
          %447 = sbr.rel (%p445) target = $region76
        $region75: #{tpu_custom_call.1} parent=71 // pred_region
          %448 = dma.done %s441, 128
        $region76: #{tpu_custom_call.1} parent=71 // pred_fallthru
          _
        %s449 = sand.u32 %s43, 1
        %s450 = scalar_lea.sflag [#allocation3], %s449
        %s451 = sand.u32 %s43, 1
        %s452 = smul.addr %s451, 8
        %s453 = scalar_lea.vmem [#allocation2], %s452
        %p454 = pneg %p56
        %p455 = pneg %p53
        %p456 = pneg %p77
        %p457 = pneg %p74
        %p458 = pneg %p98
        %p459 = pneg %p95
        %p460 = pneg %p119
        %p461 = pneg %p116
        %p462 = pneg %p140
        %p463 = pneg %p137
        %p464 = pneg %p161
        %p465 = pneg %p158
        %p466 = pneg %p182
        %p467 = pneg %p179
        %p468 = pneg %p203
        %p469 = pneg %p200
        %p470 = pneg %p224
        %p471 = pneg %p221
        %p472 = pneg %p245
        %p473 = pneg %p242
        %p474 = pneg %p266
        %p475 = pneg %p263
        %p476 = pneg %p287
        %p477 = pneg %p284
        %p478 = pneg %p308
        %p479 = pneg %p305
        %p480 = pneg %p334
        %p481 = pneg %p331
        %s482 = sand.u32 %s321, 1
        %s483 = scalar_lea.sflag [#allocation4], %s482
        %s484 = sand.u32 %s321, 1
        %s485 = smul.addr %s484, 8
        %s486 = scalar_lea.vmem [#allocation5], %s485
        %p487 = pneg %p360
        %p488 = pneg %p357
        %s489 = sand.u32 %s347, 1
        %s490 = scalar_lea.sflag [#allocation7], %s489
        %s491 = sand.u32 %s347, 1
        %s492 = smul.addr %s491, 8
        %s493 = scalar_lea.vmem [#allocation6], %s492
        %v494 = vld [vmem:[%s444] sm:$0xff]
        %v495 = vld [vmem:[%s1] sm:$0x1]
        %v496 = vld [vmem:[%s2] sm:$0x1]
        %vm497 = vcmask 261120
        %v498 = vsel %vm497, %v494, 0.0
        %499 = vadd.xlane.f32.xlu0 %v498
        %v500 = vpop.xlane.xlu0 %499
        %v501 = vrcp.pop 32.0
        %v502 = vmul.f32 %v500, %v501
        %v503 = vsub.f32 %v494, %v502
        %v504 = vmul.f32 %v503, %v503
        %v505 = vsel %vm497, %v504, 0.0
        %506 = vadd.xlane.f32.xlu0 %v505
        %v507 = vpop.xlane.xlu0 %506
        %v508 = vmul.f32 %v507, %v501
        %v509 = vadd.f32 %v508, 1e-05
        %v510 = vrsqrt.pop %v509
        %v511 = vmul.f32 %v503, %v510
        %v513 = vlaneseq
        %v514 = vshrl.u32 %v513, 7
        %v515 = vsub.s32 0, %v514
        %v516 = vrot.slane %v495, %v515
        %v518 = vmul.f32 %v511, %v516
        %v520 = vlaneseq
        %v521 = vshrl.u32 %v520, 7
        %v522 = vsub.s32 0, %v521
        %v523 = vrot.slane %v496, %v522
        %v525 = vadd.f32 %v518, %v523
        %v526 = vld [vmem:[%s3] sm:$0xff]
        %v527 = vld [vmem:[%s3 + $0x8] sm:$0xff]
        %v528 = vld [vmem:[%s3 + $0x10] sm:$0xff]
        %v529 = vld [vmem:[%s3 + $0x18] sm:$0xff]
        %v530 = vld [vmem:[%s4] sm:$0x1]
        %v532 = vlaneseq
        %v533 = vshrl.u32 %v532, 7
        %v534 = vsub.s32 0, %v533
        %v535 = vrot.slane %v530, %v534
        %v538 = vsel %vm497, %v525, 0
        %540 = vmatprep.subr.mxu0 0.0
        %541 = vmatpush1.msra.mxu0 0.0
        %542 = vmatprep.subr.mxu0 0.0
        %543 = vmatpush1.msra.mxu0 0.0
        %544 = vmatprep.subr.mxu0 0.0
        %545 = vmatpush1.msra.mxu0 0.0
        %546 = vmatprep.subr.mxu0 0.0
        %547 = vmatpush1.msra.mxu0 0.0
        %548 = vmatprep.subr.mxu0 0.0
        %549 = vmatpush1.msra.mxu0 0.0
        %550 = vmatprep.subr.mxu0 0.0
        %551 = vmatpush1.msra.mxu0 0.0
        %552 = vmatprep.subr.mxu0 0.0
        %553 = vmatpush1.msra.mxu0 0.0
        %554 = vmatprep.subr.mxu0 0.0
        %555 = vmatpush1.msra.mxu0 0.0
        %556 = vmatprep.subr.mxu0 0.0
        %557 = vmatpush1.msra.mxu0 0.0
        %558 = vmatprep.subr.mxu0 0.0
        %559 = vmatpush1.msra.mxu0 0.0
        %560 = vmatprep.subr.mxu0 0.0
        %561 = vmatpush1.msra.mxu0 0.0
        %562 = vmatprep.subr.mxu0 0.0
        %563 = vmatpush1.msra.mxu0 0.0
        %564 = vmatprep.subr.mxu0 0.0
        %565 = vmatpush1.msra.mxu0 %v529
        %566 = vmatprep.subr.mxu0 0.0
        %567 = vmatpush1.msra.mxu0 %v528
        %568 = vmatprep.subr.mxu0 0.0
        %569 = vmatpush1.msra.mxu0 %v527
        %570 = vmatprep.subr.mxu0 0.0
        %571 = vmatpush1.msra.mxu0 %v526
        %572 = vmatprep.subr.mxu0 0.0
        %573 = vmatpush2.msra.mxu0 0.0
        %574 = vmatprep.subr.mxu0 0.0
        %575 = vmatpush2.msra.mxu0 0.0
        %576 = vmatprep.subr.mxu0 0.0
        %577 = vmatpush2.msra.mxu0 0.0
        %578 = vmatprep.subr.mxu0 0.0
        %579 = vmatpush2.msra.mxu0 0.0
        %580 = vmatprep.subr.mxu0 0.0
        %581 = vmatpush2.msra.mxu0 0.0
        %582 = vmatprep.subr.mxu0 0.0
        %583 = vmatpush2.msra.mxu0 0.0
        %584 = vmatprep.subr.mxu0 0.0
        %585 = vmatpush2.msra.mxu0 0.0
        %586 = vmatprep.subr.mxu0 0.0
        %587 = vmatpush2.msra.mxu0 0.0
        %588 = vmatprep.subr.mxu0 0.0
        %589 = vmatpush2.msra.mxu0 0.0
        %590 = vmatprep.subr.mxu0 0.0
        %591 = vmatpush2.msra.mxu0 0.0
        %592 = vmatprep.subr.mxu0 0.0
        %593 = vmatpush2.msra.mxu0 0.0
        %594 = vmatprep.subr.mxu0 0.0
        %595 = vmatpush2.msra.mxu0 0.0
        %596 = vmatprep.subr.mxu0 0.0
        %597 = vmatpush2.msra.mxu0 0.0
        %598 = vmatprep.subr.mxu0 0.0
        %599 = vmatpush2.msra.mxu0 0.0
        %600 = vmatprep.subr.mxu0 0.0
        %601 = vmatpush2.msra.mxu0 0.0
        %602 = vmatprep.subr.mxu0 0.0
        %603 = vmatpush2.msra.mxu0 0.0
        %604 = vmatprep.mubr.f32.mxu0 0.0
        %605 = vmatmul.mubr.f32.gmra.mxu0 %v538
        %v606 = vpop.f32.mrf.mxu0
        %v607 = vadd.f32 %v535, %v606
        %v608 = vpop.f32.mrf.mxu0
        %609 = vdwg.mxu0
        %v610 = vmul.f32 %v607, 0.35355338
        %612 = vrot.lane.b32.xlu0 %v610, 120
        %v613 = vpop.permute.xlu0 %612
        %614 = vrot.lane.b32.xlu0 %v610, 112
        %v615 = vpop.permute.xlu0 %614
        %616 = vrot.lane.b32.xlu0 %v610, 104
        %v617 = vpop.permute.xlu0 %616
        %619 = vrot.lane.b32.xlu0 %v607, 120
        %v620 = vpop.permute.xlu0 %619
        %621 = vrot.lane.b32.xlu0 %v607, 112
        %v622 = vpop.permute.xlu0 %621
        %623 = vrot.lane.b32.xlu0 %v607, 104
        %v624 = vpop.permute.xlu0 %623
        %625 = vrot.lane.b32.xlu0 %v607, 96
        %v626 = vpop.permute.xlu0 %625
        %vm627 = vcmask 64512
        %v628 = vsel %vm627, %v610, 0
        %v630 = vsel %vm627, %v626, 0
        %632 = vmatprep.subr.mxu0 0.0
        %633 = vmatpush1.xpose.msra.mxu0 0.0
        %634 = vmatprep.subr.mxu0 0.0
        %635 = vmatpush1.xpose.msra.mxu0 0.0
        %636 = vmatprep.subr.mxu0 0.0
        %637 = vmatpush1.xpose.msra.mxu0 0.0
        %638 = vmatprep.subr.mxu0 0.0
        %639 = vmatpush1.xpose.msra.mxu0 0.0
        %640 = vmatprep.subr.mxu0 0.0
        %641 = vmatpush1.xpose.msra.mxu0 0.0
        %642 = vmatprep.subr.mxu0 0.0
        %643 = vmatpush1.xpose.msra.mxu0 0.0
        %644 = vmatprep.subr.mxu0 0.0
        %645 = vmatpush1.xpose.msra.mxu0 0.0
        %646 = vmatprep.subr.mxu0 0.0
        %647 = vmatpush1.xpose.msra.mxu0 0.0
        %648 = vmatprep.subr.mxu0 0.0
        %649 = vmatpush1.xpose.msra.mxu0 0.0
        %650 = vmatprep.subr.mxu0 0.0
        %651 = vmatpush1.xpose.msra.mxu0 0.0
        %652 = vmatprep.subr.mxu0 0.0
        %653 = vmatpush1.xpose.msra.mxu0 0.0
        %654 = vmatprep.subr.mxu0 0.0
        %655 = vmatpush1.xpose.msra.mxu0 0.0
        %656 = vmatprep.subr.mxu0 0.0
        %657 = vmatpush1.xpose.msra.mxu0 0.0
        %658 = vmatprep.subr.mxu0 0.0
        %659 = vmatpush1.xpose.msra.mxu0 0.0
        %660 = vmatprep.subr.mxu0 0.0
        %661 = vmatpush1.xpose.msra.mxu0 0.0
        %662 = vmatprep.subr.mxu0 0.0
        %663 = vmatpush1.xpose.msra.mxu0 %v630
        %664 = vmatprep.subr.mxu0 0.0
        %665 = vmatpush2.xpose.msra.mxu0 0.0
        %666 = vmatprep.subr.mxu0 0.0
        %667 = vmatpush2.xpose.msra.mxu0 0.0
        %668 = vmatprep.subr.mxu0 0.0
        %669 = vmatpush2.xpose.msra.mxu0 0.0
        %670 = vmatprep.subr.mxu0 0.0
        %671 = vmatpush2.xpose.msra.mxu0 0.0
        %672 = vmatprep.subr.mxu0 0.0
        %673 = vmatpush2.xpose.msra.mxu0 0.0
        %674 = vmatprep.subr.mxu0 0.0
        %675 = vmatpush2.xpose.msra.mxu0 0.0
        %676 = vmatprep.subr.mxu0 0.0
        %677 = vmatpush2.xpose.msra.mxu0 0.0
        %678 = vmatprep.subr.mxu0 0.0
        %679 = vmatpush2.xpose.msra.mxu0 0.0
        %680 = vmatprep.subr.mxu0 0.0
        %681 = vmatpush2.xpose.msra.mxu0 0.0
        %682 = vmatprep.subr.mxu0 0.0
        %683 = vmatpush2.xpose.msra.mxu0 0.0
        %684 = vmatprep.subr.mxu0 0.0
        %685 = vmatpush2.xpose.msra.mxu0 0.0
        %686 = vmatprep.subr.mxu0 0.0
        %687 = vmatpush2.xpose.msra.mxu0 0.0
        %688 = vmatprep.subr.mxu0 0.0
        %689 = vmatpush2.xpose.msra.mxu0 0.0
        %690 = vmatprep.subr.mxu0 0.0
        %691 = vmatpush2.xpose.msra.mxu0 0.0
        %692 = vmatprep.subr.mxu0 0.0
        %693 = vmatpush2.xpose.msra.mxu0 0.0
        %694 = vmatprep.subr.mxu0 0.0
        %695 = vmatpush2.xpose.msra.mxu0 0.0
        %696 = vmatprep.mubr.f32.mxu0 0.0
        %697 = vmatmul.mubr.f32.gmra.mxu0 %v628
        %v698 = vpop.f32.mrf.mxu0
        %v699 = vadd.f32 0.0, %v698
        %v700 = vpop.f32.mrf.mxu0
        %701 = vdwg.mxu0
        %702 = vrot.lane.b32.xlu0 %v620, 96
        %v703 = vpop.permute.xlu0 %702
        %v704 = vsel %vm627, %v613, 0
        %v706 = vsel %vm627, %v703, 0
        %708 = vmatprep.subr.mxu0 0.0
        %709 = vmatpush1.xpose.msra.mxu0 0.0
        %710 = vmatprep.subr.mxu0 0.0
        %711 = vmatpush1.xpose.msra.mxu0 0.0
        %712 = vmatprep.subr.mxu0 0.0
        %713 = vmatpush1.xpose.msra.mxu0 0.0
        %714 = vmatprep.subr.mxu0 0.0
        %715 = vmatpush1.xpose.msra.mxu0 0.0
        %716 = vmatprep.subr.mxu0 0.0
        %717 = vmatpush1.xpose.msra.mxu0 0.0
        %718 = vmatprep.subr.mxu0 0.0
        %719 = vmatpush1.xpose.msra.mxu0 0.0
        %720 = vmatprep.subr.mxu0 0.0
        %721 = vmatpush1.xpose.msra.mxu0 0.0
        %722 = vmatprep.subr.mxu0 0.0
        %723 = vmatpush1.xpose.msra.mxu0 0.0
        %724 = vmatprep.subr.mxu0 0.0
        %725 = vmatpush1.xpose.msra.mxu0 0.0
        %726 = vmatprep.subr.mxu0 0.0
        %727 = vmatpush1.xpose.msra.mxu0 0.0
        %728 = vmatprep.subr.mxu0 0.0
        %729 = vmatpush1.xpose.msra.mxu0 0.0
        %730 = vmatprep.subr.mxu0 0.0
        %731 = vmatpush1.xpose.msra.mxu0 0.0
        %732 = vmatprep.subr.mxu0 0.0
        %733 = vmatpush1.xpose.msra.mxu0 0.0
        %734 = vmatprep.subr.mxu0 0.0
        %735 = vmatpush1.xpose.msra.mxu0 0.0
        %736 = vmatprep.subr.mxu0 0.0
        %737 = vmatpush1.xpose.msra.mxu0 0.0
        %738 = vmatprep.subr.mxu0 0.0
        %739 = vmatpush1.xpose.msra.mxu0 %v706
        %740 = vmatprep.subr.mxu0 0.0
        %741 = vmatpush2.xpose.msra.mxu0 0.0
        %742 = vmatprep.subr.mxu0 0.0
        %743 = vmatpush2.xpose.msra.mxu0 0.0
        %744 = vmatprep.subr.mxu0 0.0
        %745 = vmatpush2.xpose.msra.mxu0 0.0
        %746 = vmatprep.subr.mxu0 0.0
        %747 = vmatpush2.xpose.msra.mxu0 0.0
        %748 = vmatprep.subr.mxu0 0.0
        %749 = vmatpush2.xpose.msra.mxu0 0.0
        %750 = vmatprep.subr.mxu0 0.0
        %751 = vmatpush2.xpose.msra.mxu0 0.0
        %752 = vmatprep.subr.mxu0 0.0
        %753 = vmatpush2.xpose.msra.mxu0 0.0
        %754 = vmatprep.subr.mxu0 0.0
        %755 = vmatpush2.xpose.msra.mxu0 0.0
        %756 = vmatprep.subr.mxu0 0.0
        %757 = vmatpush2.xpose.msra.mxu0 0.0
        %758 = vmatprep.subr.mxu0 0.0
        %759 = vmatpush2.xpose.msra.mxu0 0.0
        %760 = vmatprep.subr.mxu0 0.0
        %761 = vmatpush2.xpose.msra.mxu0 0.0
        %762 = vmatprep.subr.mxu0 0.0
        %763 = vmatpush2.xpose.msra.mxu0 0.0
        %764 = vmatprep.subr.mxu0 0.0
        %765 = vmatpush2.xpose.msra.mxu0 0.0
        %766 = vmatprep.subr.mxu0 0.0
        %767 = vmatpush2.xpose.msra.mxu0 0.0
        %768 = vmatprep.subr.mxu0 0.0
        %769 = vmatpush2.xpose.msra.mxu0 0.0
        %770 = vmatprep.subr.mxu0 0.0
        %771 = vmatpush2.xpose.msra.mxu0 0.0
        %772 = vmatprep.mubr.f32.mxu0 0.0
        %773 = vmatmul.mubr.f32.gmra.mxu0 %v704
        %v774 = vpop.f32.mrf.mxu0
        %v775 = vadd.f32 0.0, %v774
        %v776 = vpop.f32.mrf.mxu0
        %777 = vdwg.mxu0
        %778 = vrot.lane.b32.xlu0 %v622, 96
        %v779 = vpop.permute.xlu0 %778
        %v780 = vsel %vm627, %v615, 0
        %v782 = vsel %vm627, %v779, 0
        %784 = vmatprep.subr.mxu0 0.0
        %785 = vmatpush1.xpose.msra.mxu0 0.0
        %786 = vmatprep.subr.mxu0 0.0
        %787 = vmatpush1.xpose.msra.mxu0 0.0
        %788 = vmatprep.subr.mxu0 0.0
        %789 = vmatpush1.xpose.msra.mxu0 0.0
        %790 = vmatprep.subr.mxu0 0.0
        %791 = vmatpush1.xpose.msra.mxu0 0.0
        %792 = vmatprep.subr.mxu0 0.0
        %793 = vmatpush1.xpose.msra.mxu0 0.0
        %794 = vmatprep.subr.mxu0 0.0
        %795 = vmatpush1.xpose.msra.mxu0 0.0
        %796 = vmatprep.subr.mxu0 0.0
        %797 = vmatpush1.xpose.msra.mxu0 0.0
        %798 = vmatprep.subr.mxu0 0.0
        %799 = vmatpush1.xpose.msra.mxu0 0.0
        %800 = vmatprep.subr.mxu0 0.0
        %801 = vmatpush1.xpose.msra.mxu0 0.0
        %802 = vmatprep.subr.mxu0 0.0
        %803 = vmatpush1.xpose.msra.mxu0 0.0
        %804 = vmatprep.subr.mxu0 0.0
        %805 = vmatpush1.xpose.msra.mxu0 0.0
        %806 = vmatprep.subr.mxu0 0.0
        %807 = vmatpush1.xpose.msra.mxu0 0.0
        %808 = vmatprep.subr.mxu0 0.0
        %809 = vmatpush1.xpose.msra.mxu0 0.0
        %810 = vmatprep.subr.mxu0 0.0
        %811 = vmatpush1.xpose.msra.mxu0 0.0
        %812 = vmatprep.subr.mxu0 0.0
        %813 = vmatpush1.xpose.msra.mxu0 0.0
        %814 = vmatprep.subr.mxu0 0.0
        %815 = vmatpush1.xpose.msra.mxu0 %v782
        %816 = vmatprep.subr.mxu0 0.0
        %817 = vmatpush2.xpose.msra.mxu0 0.0
        %818 = vmatprep.subr.mxu0 0.0
        %819 = vmatpush2.xpose.msra.mxu0 0.0
        %820 = vmatprep.subr.mxu0 0.0
        %821 = vmatpush2.xpose.msra.mxu0 0.0
        %822 = vmatprep.subr.mxu0 0.0
        %823 = vmatpush2.xpose.msra.mxu0 0.0
        %824 = vmatprep.subr.mxu0 0.0
        %825 = vmatpush2.xpose.msra.mxu0 0.0
        %826 = vmatprep.subr.mxu0 0.0
        %827 = vmatpush2.xpose.msra.mxu0 0.0
        %828 = vmatprep.subr.mxu0 0.0
        %829 = vmatpush2.xpose.msra.mxu0 0.0
        %830 = vmatprep.subr.mxu0 0.0
        %831 = vmatpush2.xpose.msra.mxu0 0.0
        %832 = vmatprep.subr.mxu0 0.0
        %833 = vmatpush2.xpose.msra.mxu0 0.0
        %834 = vmatprep.subr.mxu0 0.0
        %835 = vmatpush2.xpose.msra.mxu0 0.0
        %836 = vmatprep.subr.mxu0 0.0
        %837 = vmatpush2.xpose.msra.mxu0 0.0
        %838 = vmatprep.subr.mxu0 0.0
        %839 = vmatpush2.xpose.msra.mxu0 0.0
        %840 = vmatprep.subr.mxu0 0.0
        %841 = vmatpush2.xpose.msra.mxu0 0.0
        %842 = vmatprep.subr.mxu0 0.0
        %843 = vmatpush2.xpose.msra.mxu0 0.0
        %844 = vmatprep.subr.mxu0 0.0
        %845 = vmatpush2.xpose.msra.mxu0 0.0
        %846 = vmatprep.subr.mxu0 0.0
        %847 = vmatpush2.xpose.msra.mxu0 0.0
        %848 = vmatprep.mubr.f32.mxu0 0.0
        %849 = vmatmul.mubr.f32.gmra.mxu0 %v780
        %v850 = vpop.f32.mrf.mxu0
        %v851 = vadd.f32 0.0, %v850
        %v852 = vpop.f32.mrf.mxu0
        %853 = vdwg.mxu0
        %854 = vrot.lane.b32.xlu0 %v624, 96
        %v855 = vpop.permute.xlu0 %854
        %v856 = vsel %vm627, %v617, 0
        %v858 = vsel %vm627, %v855, 0
        %860 = vmatprep.subr.mxu0 0.0
        %861 = vmatpush1.xpose.msra.mxu0 0.0
        %862 = vmatprep.subr.mxu0 0.0
        %863 = vmatpush1.xpose.msra.mxu0 0.0
        %864 = vmatprep.subr.mxu0 0.0
        %865 = vmatpush1.xpose.msra.mxu0 0.0
        %866 = vmatprep.subr.mxu0 0.0
        %867 = vmatpush1.xpose.msra.mxu0 0.0
        %868 = vmatprep.subr.mxu0 0.0
        %869 = vmatpush1.xpose.msra.mxu0 0.0
        %870 = vmatprep.subr.mxu0 0.0
        %871 = vmatpush1.xpose.msra.mxu0 0.0
        %872 = vmatprep.subr.mxu0 0.0
        %873 = vmatpush1.xpose.msra.mxu0 0.0
        %874 = vmatprep.subr.mxu0 0.0
        %875 = vmatpush1.xpose.msra.mxu0 0.0
        %876 = vmatprep.subr.mxu0 0.0
        %877 = vmatpush1.xpose.msra.mxu0 0.0
        %878 = vmatprep.subr.mxu0 0.0
        %879 = vmatpush1.xpose.msra.mxu0 0.0
        %880 = vmatprep.subr.mxu0 0.0
        %881 = vmatpush1.xpose.msra.mxu0 0.0
        %882 = vmatprep.subr.mxu0 0.0
        %883 = vmatpush1.xpose.msra.mxu0 0.0
        %884 = vmatprep.subr.mxu0 0.0
        %885 = vmatpush1.xpose.msra.mxu0 0.0
        %886 = vmatprep.subr.mxu0 0.0
        %887 = vmatpush1.xpose.msra.mxu0 0.0
        %888 = vmatprep.subr.mxu0 0.0
        %889 = vmatpush1.xpose.msra.mxu0 0.0
        %890 = vmatprep.subr.mxu0 0.0
        %891 = vmatpush1.xpose.msra.mxu0 %v858
        %892 = vmatprep.subr.mxu0 0.0
        %893 = vmatpush2.xpose.msra.mxu0 0.0
        %894 = vmatprep.subr.mxu0 0.0
        %895 = vmatpush2.xpose.msra.mxu0 0.0
        %896 = vmatprep.subr.mxu0 0.0
        %897 = vmatpush2.xpose.msra.mxu0 0.0
        %898 = vmatprep.subr.mxu0 0.0
        %899 = vmatpush2.xpose.msra.mxu0 0.0
        %900 = vmatprep.subr.mxu0 0.0
        %901 = vmatpush2.xpose.msra.mxu0 0.0
        %902 = vmatprep.subr.mxu0 0.0
        %903 = vmatpush2.xpose.msra.mxu0 0.0
        %904 = vmatprep.subr.mxu0 0.0
        %905 = vmatpush2.xpose.msra.mxu0 0.0
        %906 = vmatprep.subr.mxu0 0.0
        %907 = vmatpush2.xpose.msra.mxu0 0.0
        %908 = vmatprep.subr.mxu0 0.0
        %909 = vmatpush2.xpose.msra.mxu0 0.0
        %910 = vmatprep.subr.mxu0 0.0
        %911 = vmatpush2.xpose.msra.mxu0 0.0
        %912 = vmatprep.subr.mxu0 0.0
        %913 = vmatpush2.xpose.msra.mxu0 0.0
        %914 = vmatprep.subr.mxu0 0.0
        %915 = vmatpush2.xpose.msra.mxu0 0.0
        %916 = vmatprep.subr.mxu0 0.0
        %917 = vmatpush2.xpose.msra.mxu0 0.0
        %918 = vmatprep.subr.mxu0 0.0
        %919 = vmatpush2.xpose.msra.mxu0 0.0
        %920 = vmatprep.subr.mxu0 0.0
        %921 = vmatpush2.xpose.msra.mxu0 0.0
        %922 = vmatprep.subr.mxu0 0.0
        %923 = vmatpush2.xpose.msra.mxu0 0.0
        %924 = vmatprep.mubr.f32.mxu0 0.0
        %925 = vmatmul.mubr.f32.gmra.mxu0 %v856
        %v926 = vpop.f32.mrf.mxu0
        %v927 = vadd.f32 0.0, %v926
        %v928 = vpop.f32.mrf.mxu0
        %929 = vdwg.mxu0
        %v930 = vsel %vm627, %v699, -inf
        %931 = vmax.xlane.f32.xlu0 %v930
        %v932 = vpop.xlane.xlu0 %931
        %v933 = vsel %vm627, %v775, -inf
        %934 = vmax.xlane.f32.xlu0 %v933
        %v935 = vpop.xlane.xlu0 %934
        %v936 = vsel %vm627, %v851, -inf
        %937 = vmax.xlane.f32.xlu0 %v936
        %v938 = vpop.xlane.xlu0 %937
        %v939 = vsel %vm627, %v927, -inf
        %940 = vmax.xlane.f32.xlu0 %v939
        %v941 = vpop.xlane.xlu0 %940
        %v942 = vsub.f32 %v699, %v932
        %v943 = vsub.f32 %v775, %v935
        %v944 = vsub.f32 %v851, %v938
        %v945 = vsub.f32 %v927, %v941
        %v946 = vmul.f32 %v942, 1.442695
        %v947 = vpow.pop %v946
        %v948 = vmul.f32 %v943, 1.442695
        %v949 = vpow.pop %v948
        %v950 = vmul.f32 %v944, 1.442695
        %v951 = vpow.pop %v950
        %v952 = vmul.f32 %v945, 1.442695
        %v953 = vpow.pop %v952
        %v954 = vsel %vm627, %v947, 0.0
        %955 = vadd.xlane.f32.xlu0 %v954
        %v956 = vpop.xlane.xlu0 %955
        %v957 = vsel %vm627, %v949, 0.0
        %958 = vadd.xlane.f32.xlu0 %v957
        %v959 = vpop.xlane.xlu0 %958
        %v960 = vsel %vm627, %v951, 0.0
        %961 = vadd.xlane.f32.xlu0 %v960
        %v962 = vpop.xlane.xlu0 %961
        %v963 = vsel %vm627, %v953, 0.0
        %964 = vadd.xlane.f32.xlu0 %v963
        %v965 = vpop.xlane.xlu0 %964
        %v966 = vrcp.pop %v956
        %v967 = vrcp.pop %v959
        %v968 = vrcp.pop %v962
        %v969 = vrcp.pop %v965
        %v970 = vmul.f32 %v947, %v966
        %v971 = vmul.f32 %v949, %v967
        %v972 = vmul.f32 %v951, %v968
        %v973 = vmul.f32 %v953, %v969
        %974 = vrot.lane.b32.xlu0 %v607, 64
        %v975 = vpop.permute.xlu0 %974
        %v978 = vsel %vm627, %v970, 0
        %980 = vmatprep.subr.mxu0 0.0
        %981 = vmatpush1.msra.mxu0 0.0
        %982 = vmatprep.subr.mxu0 0.0
        %983 = vmatpush1.msra.mxu0 0.0
        %984 = vmatprep.subr.mxu0 0.0
        %985 = vmatpush1.msra.mxu0 0.0
        %986 = vmatprep.subr.mxu0 0.0
        %987 = vmatpush1.msra.mxu0 0.0
        %988 = vmatprep.subr.mxu0 0.0
        %989 = vmatpush1.msra.mxu0 0.0
        %990 = vmatprep.subr.mxu0 0.0
        %991 = vmatpush1.msra.mxu0 0.0
        %992 = vmatprep.subr.mxu0 0.0
        %993 = vmatpush1.msra.mxu0 0.0
        %994 = vmatprep.subr.mxu0 0.0
        %995 = vmatpush1.msra.mxu0 0.0
        %996 = vmatprep.subr.mxu0 0.0
        %997 = vmatpush1.msra.mxu0 0.0
        %998 = vmatprep.subr.mxu0 0.0
        %999 = vmatpush1.msra.mxu0 0.0
        %1000 = vmatprep.subr.mxu0 0.0
        %1001 = vmatpush1.msra.mxu0 0.0
        %1002 = vmatprep.subr.mxu0 0.0
        %1003 = vmatpush1.msra.mxu0 0.0
        %1004 = vmatprep.subr.mxu0 0.0
        %1005 = vmatpush1.msra.mxu0 0.0
        %1006 = vmatprep.subr.mxu0 0.0
        %1007 = vmatpush1.msra.mxu0 0.0
        %1008 = vmatprep.subr.mxu0 0.0
        %1009 = vmatpush1.msra.mxu0 0.0
        %1010 = vmatprep.subr.mxu0 0.0
        %1011 = vmatpush1.msra.mxu0 %v975
        %1012 = vmatprep.subr.mxu0 0.0
        %1013 = vmatpush2.msra.mxu0 0.0
        %1014 = vmatprep.subr.mxu0 0.0
        %1015 = vmatpush2.msra.mxu0 0.0
        %1016 = vmatprep.subr.mxu0 0.0
        %1017 = vmatpush2.msra.mxu0 0.0
        %1018 = vmatprep.subr.mxu0 0.0
        %1019 = vmatpush2.msra.mxu0 0.0
        %1020 = vmatprep.subr.mxu0 0.0
        %1021 = vmatpush2.msra.mxu0 0.0
        %1022 = vmatprep.subr.mxu0 0.0
        %1023 = vmatpush2.msra.mxu0 0.0
        %1024 = vmatprep.subr.mxu0 0.0
        %1025 = vmatpush2.msra.mxu0 0.0
        %1026 = vmatprep.subr.mxu0 0.0
        %1027 = vmatpush2.msra.mxu0 0.0
        %1028 = vmatprep.subr.mxu0 0.0
        %1029 = vmatpush2.msra.mxu0 0.0
        %1030 = vmatprep.subr.mxu0 0.0
        %1031 = vmatpush2.msra.mxu0 0.0
        %1032 = vmatprep.subr.mxu0 0.0
        %1033 = vmatpush2.msra.mxu0 0.0
        %1034 = vmatprep.subr.mxu0 0.0
        %1035 = vmatpush2.msra.mxu0 0.0
        %1036 = vmatprep.subr.mxu0 0.0
        %1037 = vmatpush2.msra.mxu0 0.0
        %1038 = vmatprep.subr.mxu0 0.0
        %1039 = vmatpush2.msra.mxu0 0.0
        %1040 = vmatprep.subr.mxu0 0.0
        %1041 = vmatpush2.msra.mxu0 0.0
        %1042 = vmatprep.subr.mxu0 0.0
        %1043 = vmatpush2.msra.mxu0 0.0
        %1044 = vmatprep.mubr.f32.mxu0 0.0
        %1045 = vmatmul.mubr.f32.gmra.mxu0 %v978
        %v1046 = vpop.f32.mrf.mxu0
        %v1047 = vadd.f32 0.0, %v1046
        %v1048 = vpop.f32.mrf.mxu0
        %1049 = vdwg.mxu0
        %1050 = vrot.lane.b32.xlu0 %v620, 64
        %v1051 = vpop.permute.xlu0 %1050
        %v1054 = vsel %vm627, %v971, 0
        %1056 = vmatprep.subr.mxu0 0.0
        %1057 = vmatpush1.msra.mxu0 0.0
        %1058 = vmatprep.subr.mxu0 0.0
        %1059 = vmatpush1.msra.mxu0 0.0
        %1060 = vmatprep.subr.mxu0 0.0
        %1061 = vmatpush1.msra.mxu0 0.0
        %1062 = vmatprep.subr.mxu0 0.0
        %1063 = vmatpush1.msra.mxu0 0.0
        %1064 = vmatprep.subr.mxu0 0.0
        %1065 = vmatpush1.msra.mxu0 0.0
        %1066 = vmatprep.subr.mxu0 0.0
        %1067 = vmatpush1.msra.mxu0 0.0
        %1068 = vmatprep.subr.mxu0 0.0
        %1069 = vmatpush1.msra.mxu0 0.0
        %1070 = vmatprep.subr.mxu0 0.0
        %1071 = vmatpush1.msra.mxu0 0.0
        %1072 = vmatprep.subr.mxu0 0.0
        %1073 = vmatpush1.msra.mxu0 0.0
        %1074 = vmatprep.subr.mxu0 0.0
        %1075 = vmatpush1.msra.mxu0 0.0
        %1076 = vmatprep.subr.mxu0 0.0
        %1077 = vmatpush1.msra.mxu0 0.0
        %1078 = vmatprep.subr.mxu0 0.0
        %1079 = vmatpush1.msra.mxu0 0.0
        %1080 = vmatprep.subr.mxu0 0.0
        %1081 = vmatpush1.msra.mxu0 0.0
        %1082 = vmatprep.subr.mxu0 0.0
        %1083 = vmatpush1.msra.mxu0 0.0
        %1084 = vmatprep.subr.mxu0 0.0
        %1085 = vmatpush1.msra.mxu0 0.0
        %1086 = vmatprep.subr.mxu0 0.0
        %1087 = vmatpush1.msra.mxu0 %v1051
        %1088 = vmatprep.subr.mxu0 0.0
        %1089 = vmatpush2.msra.mxu0 0.0
        %1090 = vmatprep.subr.mxu0 0.0
        %1091 = vmatpush2.msra.mxu0 0.0
        %1092 = vmatprep.subr.mxu0 0.0
        %1093 = vmatpush2.msra.mxu0 0.0
        %1094 = vmatprep.subr.mxu0 0.0
        %1095 = vmatpush2.msra.mxu0 0.0
        %1096 = vmatprep.subr.mxu0 0.0
        %1097 = vmatpush2.msra.mxu0 0.0
        %1098 = vmatprep.subr.mxu0 0.0
        %1099 = vmatpush2.msra.mxu0 0.0
        %1100 = vmatprep.subr.mxu0 0.0
        %1101 = vmatpush2.msra.mxu0 0.0
        %1102 = vmatprep.subr.mxu0 0.0
        %1103 = vmatpush2.msra.mxu0 0.0
        %1104 = vmatprep.subr.mxu0 0.0
        %1105 = vmatpush2.msra.mxu0 0.0
        %1106 = vmatprep.subr.mxu0 0.0
        %1107 = vmatpush2.msra.mxu0 0.0
        %1108 = vmatprep.subr.mxu0 0.0
        %1109 = vmatpush2.msra.mxu0 0.0
        %1110 = vmatprep.subr.mxu0 0.0
        %1111 = vmatpush2.msra.mxu0 0.0
        %1112 = vmatprep.subr.mxu0 0.0
        %1113 = vmatpush2.msra.mxu0 0.0
        %1114 = vmatprep.subr.mxu0 0.0
        %1115 = vmatpush2.msra.mxu0 0.0
        %1116 = vmatprep.subr.mxu0 0.0
        %1117 = vmatpush2.msra.mxu0 0.0
        %1118 = vmatprep.subr.mxu0 0.0
        %1119 = vmatpush2.msra.mxu0 0.0
        %1120 = vmatprep.mubr.f32.mxu0 0.0
        %1121 = vmatmul.mubr.f32.gmra.mxu0 %v1054
        %v1122 = vpop.f32.mrf.mxu0
        %v1123 = vadd.f32 0.0, %v1122
        %v1124 = vpop.f32.mrf.mxu0
        %1125 = vdwg.mxu0
        %1126 = vrot.lane.b32.xlu0 %v622, 64
        %v1127 = vpop.permute.xlu0 %1126
        %v1130 = vsel %vm627, %v972, 0
        %1132 = vmatprep.subr.mxu0 0.0
        %1133 = vmatpush1.msra.mxu0 0.0
        %1134 = vmatprep.subr.mxu0 0.0
        %1135 = vmatpush1.msra.mxu0 0.0
        %1136 = vmatprep.subr.mxu0 0.0
        %1137 = vmatpush1.msra.mxu0 0.0
        %1138 = vmatprep.subr.mxu0 0.0
        %1139 = vmatpush1.msra.mxu0 0.0
        %1140 = vmatprep.subr.mxu0 0.0
        %1141 = vmatpush1.msra.mxu0 0.0
        %1142 = vmatprep.subr.mxu0 0.0
        %1143 = vmatpush1.msra.mxu0 0.0
        %1144 = vmatprep.subr.mxu0 0.0
        %1145 = vmatpush1.msra.mxu0 0.0
        %1146 = vmatprep.subr.mxu0 0.0
        %1147 = vmatpush1.msra.mxu0 0.0
        %1148 = vmatprep.subr.mxu0 0.0
        %1149 = vmatpush1.msra.mxu0 0.0
        %1150 = vmatprep.subr.mxu0 0.0
        %1151 = vmatpush1.msra.mxu0 0.0
        %1152 = vmatprep.subr.mxu0 0.0
        %1153 = vmatpush1.msra.mxu0 0.0
        %1154 = vmatprep.subr.mxu0 0.0
        %1155 = vmatpush1.msra.mxu0 0.0
        %1156 = vmatprep.subr.mxu0 0.0
        %1157 = vmatpush1.msra.mxu0 0.0
        %1158 = vmatprep.subr.mxu0 0.0
        %1159 = vmatpush1.msra.mxu0 0.0
        %1160 = vmatprep.subr.mxu0 0.0
        %1161 = vmatpush1.msra.mxu0 0.0
        %1162 = vmatprep.subr.mxu0 0.0
        %1163 = vmatpush1.msra.mxu0 %v1127
        %1164 = vmatprep.subr.mxu0 0.0
        %1165 = vmatpush2.msra.mxu0 0.0
        %1166 = vmatprep.subr.mxu0 0.0
        %1167 = vmatpush2.msra.mxu0 0.0
        %1168 = vmatprep.subr.mxu0 0.0
        %1169 = vmatpush2.msra.mxu0 0.0
        %1170 = vmatprep.subr.mxu0 0.0
        %1171 = vmatpush2.msra.mxu0 0.0
        %1172 = vmatprep.subr.mxu0 0.0
        %1173 = vmatpush2.msra.mxu0 0.0
        %1174 = vmatprep.subr.mxu0 0.0
        %1175 = vmatpush2.msra.mxu0 0.0
        %1176 = vmatprep.subr.mxu0 0.0
        %1177 = vmatpush2.msra.mxu0 0.0
        %1178 = vmatprep.subr.mxu0 0.0
        %1179 = vmatpush2.msra.mxu0 0.0
        %1180 = vmatprep.subr.mxu0 0.0
        %1181 = vmatpush2.msra.mxu0 0.0
        %1182 = vmatprep.subr.mxu0 0.0
        %1183 = vmatpush2.msra.mxu0 0.0
        %1184 = vmatprep.subr.mxu0 0.0
        %1185 = vmatpush2.msra.mxu0 0.0
        %1186 = vmatprep.subr.mxu0 0.0
        %1187 = vmatpush2.msra.mxu0 0.0
        %1188 = vmatprep.subr.mxu0 0.0
        %1189 = vmatpush2.msra.mxu0 0.0
        %1190 = vmatprep.subr.mxu0 0.0
        %1191 = vmatpush2.msra.mxu0 0.0
        %1192 = vmatprep.subr.mxu0 0.0
        %1193 = vmatpush2.msra.mxu0 0.0
        %1194 = vmatprep.subr.mxu0 0.0
        %1195 = vmatpush2.msra.mxu0 0.0
        %1196 = vmatprep.mubr.f32.mxu0 0.0
        %1197 = vmatmul.mubr.f32.gmra.mxu0 %v1130
        %v1198 = vpop.f32.mrf.mxu0
        %v1199 = vadd.f32 0.0, %v1198
        %v1200 = vpop.f32.mrf.mxu0
        %1201 = vdwg.mxu0
        %1202 = vrot.lane.b32.xlu0 %v624, 64
        %v1203 = vpop.permute.xlu0 %1202
        %v1206 = vsel %vm627, %v973, 0
        %1208 = vmatprep.subr.mxu0 0.0
        %1209 = vmatpush1.msra.mxu0 0.0
        %1210 = vmatprep.subr.mxu0 0.0
        %1211 = vmatpush1.msra.mxu0 0.0
        %1212 = vmatprep.subr.mxu0 0.0
        %1213 = vmatpush1.msra.mxu0 0.0
        %1214 = vmatprep.subr.mxu0 0.0
        %1215 = vmatpush1.msra.mxu0 0.0
        %1216 = vmatprep.subr.mxu0 0.0
        %1217 = vmatpush1.msra.mxu0 0.0
        %1218 = vmatprep.subr.mxu0 0.0
        %1219 = vmatpush1.msra.mxu0 0.0
        %1220 = vmatprep.subr.mxu0 0.0
        %1221 = vmatpush1.msra.mxu0 0.0
        %1222 = vmatprep.subr.mxu0 0.0
        %1223 = vmatpush1.msra.mxu0 0.0
        %1224 = vmatprep.subr.mxu0 0.0
        %1225 = vmatpush1.msra.mxu0 0.0
        %1226 = vmatprep.subr.mxu0 0.0
        %1227 = vmatpush1.msra.mxu0 0.0
        %1228 = vmatprep.subr.mxu0 0.0
        %1229 = vmatpush1.msra.mxu0 0.0
        %1230 = vmatprep.subr.mxu0 0.0
        %1231 = vmatpush1.msra.mxu0 0.0
        %1232 = vmatprep.subr.mxu0 0.0
        %1233 = vmatpush1.msra.mxu0 0.0
        %1234 = vmatprep.subr.mxu0 0.0
        %1235 = vmatpush1.msra.mxu0 0.0
        %1236 = vmatprep.subr.mxu0 0.0
        %1237 = vmatpush1.msra.mxu0 0.0
        %1238 = vmatprep.subr.mxu0 0.0
        %1239 = vmatpush1.msra.mxu0 %v1203
        %1240 = vmatprep.subr.mxu0 0.0
        %1241 = vmatpush2.msra.mxu0 0.0
        %1242 = vmatprep.subr.mxu0 0.0
        %1243 = vmatpush2.msra.mxu0 0.0
        %1244 = vmatprep.subr.mxu0 0.0
        %1245 = vmatpush2.msra.mxu0 0.0
        %1246 = vmatprep.subr.mxu0 0.0
        %1247 = vmatpush2.msra.mxu0 0.0
        %1248 = vmatprep.subr.mxu0 0.0
        %1249 = vmatpush2.msra.mxu0 0.0
        %1250 = vmatprep.subr.mxu0 0.0
        %1251 = vmatpush2.msra.mxu0 0.0
        %1252 = vmatprep.subr.mxu0 0.0
        %1253 = vmatpush2.msra.mxu0 0.0
        %1254 = vmatprep.subr.mxu0 0.0
        %1255 = vmatpush2.msra.mxu0 0.0
        %1256 = vmatprep.subr.mxu0 0.0
        %1257 = vmatpush2.msra.mxu0 0.0
        %1258 = vmatprep.subr.mxu0 0.0
        %1259 = vmatpush2.msra.mxu0 0.0
        %1260 = vmatprep.subr.mxu0 0.0
        %1261 = vmatpush2.msra.mxu0 0.0
        %1262 = vmatprep.subr.mxu0 0.0
        %1263 = vmatpush2.msra.mxu0 0.0
        %1264 = vmatprep.subr.mxu0 0.0
        %1265 = vmatpush2.msra.mxu0 0.0
        %1266 = vmatprep.subr.mxu0 0.0
        %1267 = vmatpush2.msra.mxu0 0.0
        %1268 = vmatprep.subr.mxu0 0.0
        %1269 = vmatpush2.msra.mxu0 0.0
        %1270 = vmatprep.subr.mxu0 0.0
        %1271 = vmatpush2.msra.mxu0 0.0
        %1272 = vmatprep.mubr.f32.mxu0 0.0
        %1273 = vmatmul.mubr.f32.gmra.mxu0 %v1206
        %v1274 = vpop.f32.mrf.mxu0
        %v1275 = vadd.f32 0.0, %v1274
        %v1276 = vpop.f32.mrf.mxu0
        %1277 = vdwg.mxu0
        %v1278 = vld [vmem:[%s5] sm:$0xff]
        %v1279 = vld [vmem:[%s5 + $0x8] sm:$0xff]
        %v1280 = vld [vmem:[%s5 + $0x10] sm:$0xff]
        %v1281 = vld [vmem:[%s5 + $0x18] sm:$0xff]
        %v1282 = vld [vmem:[%s6] sm:$0x1]
        %v1284 = vlaneseq
        %v1285 = vshrl.u32 %v1284, 7
        %v1286 = vsub.s32 0, %v1285
        %v1287 = vrot.slane %v1282, %v1286
        %v1289 = vadd.f32 %v1287, 0.0
        %v1291 = vsel %vm627, %v1047, 0
        %1293 = vmatprep.subr.mxu0 0.0
        %1294 = vmatpush1.msra.mxu0 0.0
        %1295 = vmatprep.subr.mxu0 0.0
        %1296 = vmatpush1.msra.mxu0 0.0
        %1297 = vmatprep.subr.mxu0 0.0
        %1298 = vmatpush1.msra.mxu0 0.0
        %1299 = vmatprep.subr.mxu0 0.0
        %1300 = vmatpush1.msra.mxu0 0.0
        %1301 = vmatprep.subr.mxu0 0.0
        %1302 = vmatpush1.msra.mxu0 0.0
        %1303 = vmatprep.subr.mxu0 0.0
        %1304 = vmatpush1.msra.mxu0 0.0
        %1305 = vmatprep.subr.mxu0 0.0
        %1306 = vmatpush1.msra.mxu0 0.0
        %1307 = vmatprep.subr.mxu0 0.0
        %1308 = vmatpush1.msra.mxu0 0.0
        %1309 = vmatprep.subr.mxu0 0.0
        %1310 = vmatpush1.msra.mxu0 0.0
        %1311 = vmatprep.subr.mxu0 0.0
        %1312 = vmatpush1.msra.mxu0 0.0
        %1313 = vmatprep.subr.mxu0 0.0
        %1314 = vmatpush1.msra.mxu0 0.0
        %1315 = vmatprep.subr.mxu0 0.0
        %1316 = vmatpush1.msra.mxu0 0.0
        %1317 = vmatprep.subr.mxu0 0.0
        %1318 = vmatpush1.msra.mxu0 0.0
        %1319 = vmatprep.subr.mxu0 0.0
        %1320 = vmatpush1.msra.mxu0 0.0
        %1321 = vmatprep.subr.mxu0 0.0
        %1322 = vmatpush1.msra.mxu0 0.0
        %1323 = vmatprep.subr.mxu0 0.0
        %1324 = vmatpush1.msra.mxu0 %v1278
        %1325 = vmatprep.subr.mxu0 0.0
        %1326 = vmatpush2.msra.mxu0 0.0
        %1327 = vmatprep.subr.mxu0 0.0
        %1328 = vmatpush2.msra.mxu0 0.0
        %1329 = vmatprep.subr.mxu0 0.0
        %1330 = vmatpush2.msra.mxu0 0.0
        %1331 = vmatprep.subr.mxu0 0.0
        %1332 = vmatpush2.msra.mxu0 0.0
        %1333 = vmatprep.subr.mxu0 0.0
        %1334 = vmatpush2.msra.mxu0 0.0
        %1335 = vmatprep.subr.mxu0 0.0
        %1336 = vmatpush2.msra.mxu0 0.0
        %1337 = vmatprep.subr.mxu0 0.0
        %1338 = vmatpush2.msra.mxu0 0.0
        %1339 = vmatprep.subr.mxu0 0.0
        %1340 = vmatpush2.msra.mxu0 0.0
        %1341 = vmatprep.subr.mxu0 0.0
        %1342 = vmatpush2.msra.mxu0 0.0
        %1343 = vmatprep.subr.mxu0 0.0
        %1344 = vmatpush2.msra.mxu0 0.0
        %1345 = vmatprep.subr.mxu0 0.0
        %1346 = vmatpush2.msra.mxu0 0.0
        %1347 = vmatprep.subr.mxu0 0.0
        %1348 = vmatpush2.msra.mxu0 0.0
        %1349 = vmatprep.subr.mxu0 0.0
        %1350 = vmatpush2.msra.mxu0 0.0
        %1351 = vmatprep.subr.mxu0 0.0
        %1352 = vmatpush2.msra.mxu0 0.0
        %1353 = vmatprep.subr.mxu0 0.0
        %1354 = vmatpush2.msra.mxu0 0.0
        %1355 = vmatprep.subr.mxu0 0.0
        %1356 = vmatpush2.msra.mxu0 0.0
        %1357 = vmatprep.mubr.f32.mxu0 0.0
        %1358 = vmatmul.mubr.f32.gmra.mxu0 %v1291
        %v1359 = vpop.f32.mrf.mxu0
        %v1360 = vadd.f32 0.0, %v1359
        %v1361 = vpop.f32.mrf.mxu0
        %1362 = vdwg.mxu0
        %v1363 = vadd.f32 %v1289, %v1360
        %v1365 = vsel %vm627, %v1123, 0
        %1367 = vmatprep.subr.mxu0 0.0
        %1368 = vmatpush1.msra.mxu0 0.0
        %1369 = vmatprep.subr.mxu0 0.0
        %1370 = vmatpush1.msra.mxu0 0.0
        %1371 = vmatprep.subr.mxu0 0.0
        %1372 = vmatpush1.msra.mxu0 0.0
        %1373 = vmatprep.subr.mxu0 0.0
        %1374 = vmatpush1.msra.mxu0 0.0
        %1375 = vmatprep.subr.mxu0 0.0
        %1376 = vmatpush1.msra.mxu0 0.0
        %1377 = vmatprep.subr.mxu0 0.0
        %1378 = vmatpush1.msra.mxu0 0.0
        %1379 = vmatprep.subr.mxu0 0.0
        %1380 = vmatpush1.msra.mxu0 0.0
        %1381 = vmatprep.subr.mxu0 0.0
        %1382 = vmatpush1.msra.mxu0 0.0
        %1383 = vmatprep.subr.mxu0 0.0
        %1384 = vmatpush1.msra.mxu0 0.0
        %1385 = vmatprep.subr.mxu0 0.0
        %1386 = vmatpush1.msra.mxu0 0.0
        %1387 = vmatprep.subr.mxu0 0.0
        %1388 = vmatpush1.msra.mxu0 0.0
        %1389 = vmatprep.subr.mxu0 0.0
        %1390 = vmatpush1.msra.mxu0 0.0
        %1391 = vmatprep.subr.mxu0 0.0
        %1392 = vmatpush1.msra.mxu0 0.0
        %1393 = vmatprep.subr.mxu0 0.0
        %1394 = vmatpush1.msra.mxu0 0.0
        %1395 = vmatprep.subr.mxu0 0.0
        %1396 = vmatpush1.msra.mxu0 0.0
        %1397 = vmatprep.subr.mxu0 0.0
        %1398 = vmatpush1.msra.mxu0 %v1279
        %1399 = vmatprep.subr.mxu0 0.0
        %1400 = vmatpush2.msra.mxu0 0.0
        %1401 = vmatprep.subr.mxu0 0.0
        %1402 = vmatpush2.msra.mxu0 0.0
        %1403 = vmatprep.subr.mxu0 0.0
        %1404 = vmatpush2.msra.mxu0 0.0
        %1405 = vmatprep.subr.mxu0 0.0
        %1406 = vmatpush2.msra.mxu0 0.0
        %1407 = vmatprep.subr.mxu0 0.0
        %1408 = vmatpush2.msra.mxu0 0.0
        %1409 = vmatprep.subr.mxu0 0.0
        %1410 = vmatpush2.msra.mxu0 0.0
        %1411 = vmatprep.subr.mxu0 0.0
        %1412 = vmatpush2.msra.mxu0 0.0
        %1413 = vmatprep.subr.mxu0 0.0
        %1414 = vmatpush2.msra.mxu0 0.0
        %1415 = vmatprep.subr.mxu0 0.0
        %1416 = vmatpush2.msra.mxu0 0.0
        %1417 = vmatprep.subr.mxu0 0.0
        %1418 = vmatpush2.msra.mxu0 0.0
        %1419 = vmatprep.subr.mxu0 0.0
        %1420 = vmatpush2.msra.mxu0 0.0
        %1421 = vmatprep.subr.mxu0 0.0
        %1422 = vmatpush2.msra.mxu0 0.0
        %1423 = vmatprep.subr.mxu0 0.0
        %1424 = vmatpush2.msra.mxu0 0.0
        %1425 = vmatprep.subr.mxu0 0.0
        %1426 = vmatpush2.msra.mxu0 0.0
        %1427 = vmatprep.subr.mxu0 0.0
        %1428 = vmatpush2.msra.mxu0 0.0
        %1429 = vmatprep.subr.mxu0 0.0
        %1430 = vmatpush2.msra.mxu0 0.0
        %1431 = vmatprep.mubr.f32.mxu0 0.0
        %1432 = vmatmul.mubr.f32.gmra.mxu0 %v1365
        %v1433 = vpop.f32.mrf.mxu0
        %v1434 = vadd.f32 0.0, %v1433
        %v1435 = vpop.f32.mrf.mxu0
        %1436 = vdwg.mxu0
        %v1437 = vadd.f32 %v1363, %v1434
        %v1439 = vsel %vm627, %v1199, 0
        %1441 = vmatprep.subr.mxu0 0.0
        %1442 = vmatpush1.msra.mxu0 0.0
        %1443 = vmatprep.subr.mxu0 0.0
        %1444 = vmatpush1.msra.mxu0 0.0
        %1445 = vmatprep.subr.mxu0 0.0
        %1446 = vmatpush1.msra.mxu0 0.0
        %1447 = vmatprep.subr.mxu0 0.0
        %1448 = vmatpush1.msra.mxu0 0.0
        %1449 = vmatprep.subr.mxu0 0.0
        %1450 = vmatpush1.msra.mxu0 0.0
        %1451 = vmatprep.subr.mxu0 0.0
        %1452 = vmatpush1.msra.mxu0 0.0
        %1453 = vmatprep.subr.mxu0 0.0
        %1454 = vmatpush1.msra.mxu0 0.0
        %1455 = vmatprep.subr.mxu0 0.0
        %1456 = vmatpush1.msra.mxu0 0.0
        %1457 = vmatprep.subr.mxu0 0.0
        %1458 = vmatpush1.msra.mxu0 0.0
        %1459 = vmatprep.subr.mxu0 0.0
        %1460 = vmatpush1.msra.mxu0 0.0
        %1461 = vmatprep.subr.mxu0 0.0
        %1462 = vmatpush1.msra.mxu0 0.0
        %1463 = vmatprep.subr.mxu0 0.0
        %1464 = vmatpush1.msra.mxu0 0.0
        %1465 = vmatprep.subr.mxu0 0.0
        %1466 = vmatpush1.msra.mxu0 0.0
        %1467 = vmatprep.subr.mxu0 0.0
        %1468 = vmatpush1.msra.mxu0 0.0
        %1469 = vmatprep.subr.mxu0 0.0
        %1470 = vmatpush1.msra.mxu0 0.0
        %1471 = vmatprep.subr.mxu0 0.0
        %1472 = vmatpush1.msra.mxu0 %v1280
        %1473 = vmatprep.subr.mxu0 0.0
        %1474 = vmatpush2.msra.mxu0 0.0
        %1475 = vmatprep.subr.mxu0 0.0
        %1476 = vmatpush2.msra.mxu0 0.0
        %1477 = vmatprep.subr.mxu0 0.0
        %1478 = vmatpush2.msra.mxu0 0.0
        %1479 = vmatprep.subr.mxu0 0.0
        %1480 = vmatpush2.msra.mxu0 0.0
        %1481 = vmatprep.subr.mxu0 0.0
        %1482 = vmatpush2.msra.mxu0 0.0
        %1483 = vmatprep.subr.mxu0 0.0
        %1484 = vmatpush2.msra.mxu0 0.0
        %1485 = vmatprep.subr.mxu0 0.0
        %1486 = vmatpush2.msra.mxu0 0.0
        %1487 = vmatprep.subr.mxu0 0.0
        %1488 = vmatpush2.msra.mxu0 0.0
        %1489 = vmatprep.subr.mxu0 0.0
        %1490 = vmatpush2.msra.mxu0 0.0
        %1491 = vmatprep.subr.mxu0 0.0
        %1492 = vmatpush2.msra.mxu0 0.0
        %1493 = vmatprep.subr.mxu0 0.0
        %1494 = vmatpush2.msra.mxu0 0.0
        %1495 = vmatprep.subr.mxu0 0.0
        %1496 = vmatpush2.msra.mxu0 0.0
        %1497 = vmatprep.subr.mxu0 0.0
        %1498 = vmatpush2.msra.mxu0 0.0
        %1499 = vmatprep.subr.mxu0 0.0
        %1500 = vmatpush2.msra.mxu0 0.0
        %1501 = vmatprep.subr.mxu0 0.0
        %1502 = vmatpush2.msra.mxu0 0.0
        %1503 = vmatprep.subr.mxu0 0.0
        %1504 = vmatpush2.msra.mxu0 0.0
        %1505 = vmatprep.mubr.f32.mxu0 0.0
        %1506 = vmatmul.mubr.f32.gmra.mxu0 %v1439
        %v1507 = vpop.f32.mrf.mxu0
        %v1508 = vadd.f32 0.0, %v1507
        %v1509 = vpop.f32.mrf.mxu0
        %1510 = vdwg.mxu0
        %v1511 = vadd.f32 %v1437, %v1508
        %v1513 = vsel %vm627, %v1275, 0
        %1515 = vmatprep.subr.mxu0 0.0
        %1516 = vmatpush1.msra.mxu0 0.0
        %1517 = vmatprep.subr.mxu0 0.0
        %1518 = vmatpush1.msra.mxu0 0.0
        %1519 = vmatprep.subr.mxu0 0.0
        %1520 = vmatpush1.msra.mxu0 0.0
        %1521 = vmatprep.subr.mxu0 0.0
        %1522 = vmatpush1.msra.mxu0 0.0
        %1523 = vmatprep.subr.mxu0 0.0
        %1524 = vmatpush1.msra.mxu0 0.0
        %1525 = vmatprep.subr.mxu0 0.0
        %1526 = vmatpush1.msra.mxu0 0.0
        %1527 = vmatprep.subr.mxu0 0.0
        %1528 = vmatpush1.msra.mxu0 0.0
        %1529 = vmatprep.subr.mxu0 0.0
        %1530 = vmatpush1.msra.mxu0 0.0
        %1531 = vmatprep.subr.mxu0 0.0
        %1532 = vmatpush1.msra.mxu0 0.0
        %1533 = vmatprep.subr.mxu0 0.0
        %1534 = vmatpush1.msra.mxu0 0.0
        %1535 = vmatprep.subr.mxu0 0.0
        %1536 = vmatpush1.msra.mxu0 0.0
        %1537 = vmatprep.subr.mxu0 0.0
        %1538 = vmatpush1.msra.mxu0 0.0
        %1539 = vmatprep.subr.mxu0 0.0
        %1540 = vmatpush1.msra.mxu0 0.0
        %1541 = vmatprep.subr.mxu0 0.0
        %1542 = vmatpush1.msra.mxu0 0.0
        %1543 = vmatprep.subr.mxu0 0.0
        %1544 = vmatpush1.msra.mxu0 0.0
        %1545 = vmatprep.subr.mxu0 0.0
        %1546 = vmatpush1.msra.mxu0 %v1281
        %1547 = vmatprep.subr.mxu0 0.0
        %1548 = vmatpush2.msra.mxu0 0.0
        %1549 = vmatprep.subr.mxu0 0.0
        %1550 = vmatpush2.msra.mxu0 0.0
        %1551 = vmatprep.subr.mxu0 0.0
        %1552 = vmatpush2.msra.mxu0 0.0
        %1553 = vmatprep.subr.mxu0 0.0
        %1554 = vmatpush2.msra.mxu0 0.0
        %1555 = vmatprep.subr.mxu0 0.0
        %1556 = vmatpush2.msra.mxu0 0.0
        %1557 = vmatprep.subr.mxu0 0.0
        %1558 = vmatpush2.msra.mxu0 0.0
        %1559 = vmatprep.subr.mxu0 0.0
        %1560 = vmatpush2.msra.mxu0 0.0
        %1561 = vmatprep.subr.mxu0 0.0
        %1562 = vmatpush2.msra.mxu0 0.0
        %1563 = vmatprep.subr.mxu0 0.0
        %1564 = vmatpush2.msra.mxu0 0.0
        %1565 = vmatprep.subr.mxu0 0.0
        %1566 = vmatpush2.msra.mxu0 0.0
        %1567 = vmatprep.subr.mxu0 0.0
        %1568 = vmatpush2.msra.mxu0 0.0
        %1569 = vmatprep.subr.mxu0 0.0
        %1570 = vmatpush2.msra.mxu0 0.0
        %1571 = vmatprep.subr.mxu0 0.0
        %1572 = vmatpush2.msra.mxu0 0.0
        %1573 = vmatprep.subr.mxu0 0.0
        %1574 = vmatpush2.msra.mxu0 0.0
        %1575 = vmatprep.subr.mxu0 0.0
        %1576 = vmatpush2.msra.mxu0 0.0
        %1577 = vmatprep.subr.mxu0 0.0
        %1578 = vmatpush2.msra.mxu0 0.0
        %1579 = vmatprep.mubr.f32.mxu0 0.0
        %1580 = vmatmul.mubr.f32.gmra.mxu0 %v1513
        %v1581 = vpop.f32.mrf.mxu0
        %v1582 = vadd.f32 0.0, %v1581
        %v1583 = vpop.f32.mrf.mxu0
        %1584 = vdwg.mxu0
        %v1585 = vadd.f32 %v1511, %v1582
        %v1586 = vadd.f32 %v494, %v1585
        %v1587 = vld [vmem:[%s7] sm:$0x1]
        %v1588 = vld [vmem:[%s8] sm:$0x1]
        %v1589 = vsel %vm497, %v1586, 0.0
        %1590 = vadd.xlane.f32.xlu0 %v1589
        %v1591 = vpop.xlane.xlu0 %1590
        %v1592 = vmul.f32 %v1591, %v501
        %v1593 = vsub.f32 %v1586, %v1592
        %v1594 = vmul.f32 %v1593, %v1593
        %v1595 = vsel %vm497, %v1594, 0.0
        %1596 = vadd.xlane.f32.xlu0 %v1595
        %v1597 = vpop.xlane.xlu0 %1596
        %v1598 = vmul.f32 %v1597, %v501
        %v1599 = vadd.f32 %v1598, 1e-05
        %v1600 = vrsqrt.pop %v1599
        %v1601 = vmul.f32 %v1593, %v1600
        %v1603 = vlaneseq
        %v1604 = vshrl.u32 %v1603, 7
        %v1605 = vsub.s32 0, %v1604
        %v1606 = vrot.slane %v1587, %v1605
        %v1608 = vmul.f32 %v1601, %v1606
        %v1610 = vlaneseq
        %v1611 = vshrl.u32 %v1610, 7
        %v1612 = vsub.s32 0, %v1611
        %v1613 = vrot.slane %v1588, %v1612
        %v1615 = vadd.f32 %v1608, %v1613
        %v1616 = vld [vmem:[%s9] sm:$0xff]
        %v1617 = vld [vmem:[%s9 + $0x8] sm:$0xff]
        %v1618 = vld [vmem:[%s9 + $0x10] sm:$0xff]
        %v1619 = vld [vmem:[%s9 + $0x18] sm:$0xff]
        %v1620 = vld [vmem:[%s10] sm:$0x1]
        %v1622 = vlaneseq
        %v1623 = vshrl.u32 %v1622, 7
        %v1624 = vsub.s32 0, %v1623
        %v1625 = vrot.slane %v1620, %v1624
        %v1628 = vsel %vm497, %v1615, 0
        %1630 = vmatprep.subr.mxu0 0.0
        %1631 = vmatpush1.msra.mxu0 0.0
        %1632 = vmatprep.subr.mxu0 0.0
        %1633 = vmatpush1.msra.mxu0 0.0
        %1634 = vmatprep.subr.mxu0 0.0
        %1635 = vmatpush1.msra.mxu0 0.0
        %1636 = vmatprep.subr.mxu0 0.0
        %1637 = vmatpush1.msra.mxu0 0.0
        %1638 = vmatprep.subr.mxu0 0.0
        %1639 = vmatpush1.msra.mxu0 0.0
        %1640 = vmatprep.subr.mxu0 0.0
        %1641 = vmatpush1.msra.mxu0 0.0
        %1642 = vmatprep.subr.mxu0 0.0
        %1643 = vmatpush1.msra.mxu0 0.0
        %1644 = vmatprep.subr.mxu0 0.0
        %1645 = vmatpush1.msra.mxu0 0.0
        %1646 = vmatprep.subr.mxu0 0.0
        %1647 = vmatpush1.msra.mxu0 0.0
        %1648 = vmatprep.subr.mxu0 0.0
        %1649 = vmatpush1.msra.mxu0 0.0
        %1650 = vmatprep.subr.mxu0 0.0
        %1651 = vmatpush1.msra.mxu0 0.0
        %1652 = vmatprep.subr.mxu0 0.0
        %1653 = vmatpush1.msra.mxu0 0.0
        %1654 = vmatprep.subr.mxu0 0.0
        %1655 = vmatpush1.msra.mxu0 %v1619
        %1656 = vmatprep.subr.mxu0 0.0
        %1657 = vmatpush1.msra.mxu0 %v1618
        %1658 = vmatprep.subr.mxu0 0.0
        %1659 = vmatpush1.msra.mxu0 %v1617
        %1660 = vmatprep.subr.mxu0 0.0
        %1661 = vmatpush1.msra.mxu0 %v1616
        %1662 = vmatprep.subr.mxu0 0.0
        %1663 = vmatpush2.msra.mxu0 0.0
        %1664 = vmatprep.subr.mxu0 0.0
        %1665 = vmatpush2.msra.mxu0 0.0
        %1666 = vmatprep.subr.mxu0 0.0
        %1667 = vmatpush2.msra.mxu0 0.0
        %1668 = vmatprep.subr.mxu0 0.0
        %1669 = vmatpush2.msra.mxu0 0.0
        %1670 = vmatprep.subr.mxu0 0.0
        %1671 = vmatpush2.msra.mxu0 0.0
        %1672 = vmatprep.subr.mxu0 0.0
        %1673 = vmatpush2.msra.mxu0 0.0
        %1674 = vmatprep.subr.mxu0 0.0
        %1675 = vmatpush2.msra.mxu0 0.0
        %1676 = vmatprep.subr.mxu0 0.0
        %1677 = vmatpush2.msra.mxu0 0.0
        %1678 = vmatprep.subr.mxu0 0.0
        %1679 = vmatpush2.msra.mxu0 0.0
        %1680 = vmatprep.subr.mxu0 0.0
        %1681 = vmatpush2.msra.mxu0 0.0
        %1682 = vmatprep.subr.mxu0 0.0
        %1683 = vmatpush2.msra.mxu0 0.0
        %1684 = vmatprep.subr.mxu0 0.0
        %1685 = vmatpush2.msra.mxu0 0.0
        %1686 = vmatprep.subr.mxu0 0.0
        %1687 = vmatpush2.msra.mxu0 0.0
        %1688 = vmatprep.subr.mxu0 0.0
        %1689 = vmatpush2.msra.mxu0 0.0
        %1690 = vmatprep.subr.mxu0 0.0
        %1691 = vmatpush2.msra.mxu0 0.0
        %1692 = vmatprep.subr.mxu0 0.0
        %1693 = vmatpush2.msra.mxu0 0.0
        %1694 = vmatprep.mubr.f32.mxu0 0.0
        %1695 = vmatmul.mubr.f32.gmra.mxu0 %v1628
        %v1696 = vpop.f32.mrf.mxu0
        %v1697 = vadd.f32 %v1625, %v1696
        %v1698 = vpop.f32.mrf.mxu0
        %1699 = vdwg.mxu0
        %v1700 = vmax.f32 %v1697, 0.0
        %v1701 = vld [vmem:[%s11] sm:$0xff]
        %v1702 = vld [vmem:[%s11 + $0x8] sm:$0xff]
        %v1703 = vld [vmem:[%s11 + $0x10] sm:$0xff]
        %v1704 = vld [vmem:[%s11 + $0x18] sm:$0xff]
        %v1705 = vld [vmem:[%s11 + $0x20] sm:$0xff]
        %v1706 = vld [vmem:[%s11 + $0x28] sm:$0xff]
        %v1707 = vld [vmem:[%s11 + $0x30] sm:$0xff]
        %v1708 = vld [vmem:[%s11 + $0x38] sm:$0xff]
        %v1709 = vld [vmem:[%s12] sm:$0x1]
        %v1711 = vlaneseq
        %v1712 = vshrl.u32 %v1711, 7
        %v1713 = vsub.s32 0, %v1712
        %v1714 = vrot.slane %v1709, %v1713
        %vm1716 = vcmask 523264
        %v1718 = vsel %vm1716, %v1700, 0
        %1720 = vmatprep.subr.mxu0 0.0
        %1721 = vmatpush1.msra.mxu0 0.0
        %1722 = vmatprep.subr.mxu0 0.0
        %1723 = vmatpush1.msra.mxu0 0.0
        %1724 = vmatprep.subr.mxu0 0.0
        %1725 = vmatpush1.msra.mxu0 0.0
        %1726 = vmatprep.subr.mxu0 0.0
        %1727 = vmatpush1.msra.mxu0 0.0
        %1728 = vmatprep.subr.mxu0 0.0
        %1729 = vmatpush1.msra.mxu0 0.0
        %1730 = vmatprep.subr.mxu0 0.0
        %1731 = vmatpush1.msra.mxu0 0.0
        %1732 = vmatprep.subr.mxu0 0.0
        %1733 = vmatpush1.msra.mxu0 0.0
        %1734 = vmatprep.subr.mxu0 0.0
        %1735 = vmatpush1.msra.mxu0 0.0
        %1736 = vmatprep.subr.mxu0 0.0
        %1737 = vmatpush1.msra.mxu0 %v1708
        %1738 = vmatprep.subr.mxu0 0.0
        %1739 = vmatpush1.msra.mxu0 %v1707
        %1740 = vmatprep.subr.mxu0 0.0
        %1741 = vmatpush1.msra.mxu0 %v1706
        %1742 = vmatprep.subr.mxu0 0.0
        %1743 = vmatpush1.msra.mxu0 %v1705
        %1744 = vmatprep.subr.mxu0 0.0
        %1745 = vmatpush1.msra.mxu0 %v1704
        %1746 = vmatprep.subr.mxu0 0.0
        %1747 = vmatpush1.msra.mxu0 %v1703
        %1748 = vmatprep.subr.mxu0 0.0
        %1749 = vmatpush1.msra.mxu0 %v1702
        %1750 = vmatprep.subr.mxu0 0.0
        %1751 = vmatpush1.msra.mxu0 %v1701
        %1752 = vmatprep.subr.mxu0 0.0
        %1753 = vmatpush2.msra.mxu0 0.0
        %1754 = vmatprep.subr.mxu0 0.0
        %1755 = vmatpush2.msra.mxu0 0.0
        %1756 = vmatprep.subr.mxu0 0.0
        %1757 = vmatpush2.msra.mxu0 0.0
        %1758 = vmatprep.subr.mxu0 0.0
        %1759 = vmatpush2.msra.mxu0 0.0
        %1760 = vmatprep.subr.mxu0 0.0
        %1761 = vmatpush2.msra.mxu0 0.0
        %1762 = vmatprep.subr.mxu0 0.0
        %1763 = vmatpush2.msra.mxu0 0.0
        %1764 = vmatprep.subr.mxu0 0.0
        %1765 = vmatpush2.msra.mxu0 0.0
        %1766 = vmatprep.subr.mxu0 0.0
        %1767 = vmatpush2.msra.mxu0 0.0
        %1768 = vmatprep.subr.mxu0 0.0
        %1769 = vmatpush2.msra.mxu0 0.0
        %1770 = vmatprep.subr.mxu0 0.0
        %1771 = vmatpush2.msra.mxu0 0.0
        %1772 = vmatprep.subr.mxu0 0.0
        %1773 = vmatpush2.msra.mxu0 0.0
        %1774 = vmatprep.subr.mxu0 0.0
        %1775 = vmatpush2.msra.mxu0 0.0
        %1776 = vmatprep.subr.mxu0 0.0
        %1777 = vmatpush2.msra.mxu0 0.0
        %1778 = vmatprep.subr.mxu0 0.0
        %1779 = vmatpush2.msra.mxu0 0.0
        %1780 = vmatprep.subr.mxu0 0.0
        %1781 = vmatpush2.msra.mxu0 0.0
        %1782 = vmatprep.subr.mxu0 0.0
        %1783 = vmatpush2.msra.mxu0 0.0
        %1784 = vmatprep.mubr.f32.mxu0 0.0
        %1785 = vmatmul.mubr.f32.gmra.mxu0 %v1718
        %v1786 = vpop.f32.mrf.mxu0
        %v1787 = vadd.f32 %v1714, %v1786
        %v1788 = vpop.f32.mrf.mxu0
        %1789 = vdwg.mxu0
        %v1790 = vadd.f32 %v1586, %v1787
        %1791 = vst.msk [vmem:[%s486] sm:$0xff] %vm497, %v1790
        %v1792 = vsel %vm627, %v970, 0.0
        %v1793 = vsel %vm627, %v971, 0.0
        %v1794 = vadd.f32 %v1792, %v1793
        %v1795 = vsel %vm627, %v972, 0.0
        %v1796 = vadd.f32 %v1794, %v1795
        %v1797 = vsel %vm627, %v973, 0.0
        %v1798 = vadd.f32 %v1796, %v1797
        %v1799 = vrcp.pop 4.0
        %v1800 = vmul.f32 %v1798, %v1799
        %1801 = vst.msk [vmem:[%s493] sm:$0xff] %vm627, %v1800
        %s1802 = sand.u32 %s321, 1
        %s1803 = scalar_lea.sflag [#allocation4], %s1802
        %s1804 = sand.u32 %s321, 1
        %s1805 = smul.addr %s1804, 8
        %s1806 = scalar_lea.vmem [#allocation5], %s1805
        %s1807 = sand.u32 %s347, 1
        %s1808 = scalar_lea.sflag [#allocation7], %s1807
        %s1809 = sand.u32 %s347, 1
        %s1810 = smul.addr %s1809, 8
        %s1811 = scalar_lea.vmem [#allocation6], %s1810
        // Predicated region
        $region77: #{tpu_custom_call.1} parent=71 // pred_check
          %p1812 = pneg %p331
        $region78: #{tpu_custom_call.1} parent=71 // pred_check_branch
          %1814 = sbr.rel (%p1812) target = $region80
        $region79: #{tpu_custom_call.1} parent=71 // pred_region
          %s1816 = ssub.s32 128, 128
          %1817 = vsyncadd %s1803, %s1816
          %s1818 = smul.addr %s35, 128
          %s1819 = scalar_lea.hbm %s13, %s1818
          %s1821 = sshll.u32 %s1806, 4
          %s1822 = int_to_ptr.vmem [resolvable:$true] %s1821
          %1824 = dma.vmem_to_hbm [thread:$0]  %s1822, 128, %s1819, %s1803
        $region80: #{tpu_custom_call.1} parent=71 // pred_fallthru
          _
        // Predicated region
        $region81: #{tpu_custom_call.1} parent=71 // pred_check
          %p1825 = pneg %p357
        $region82: #{tpu_custom_call.1} parent=71 // pred_check_branch
          %1827 = sbr.rel (%p1825) target = $region84
        $region83: #{tpu_custom_call.1} parent=71 // pred_region
          %s1829 = ssub.s32 128, 128
          %1830 = vsyncadd %s1808, %s1829
          %s1831 = smul.addr %s35, 128
          %s1832 = scalar_lea.hbm %s14, %s1831
          %s1834 = sshll.u32 %s1811, 4
          %s1835 = int_to_ptr.vmem [resolvable:$true] %s1834
          %1837 = dma.vmem_to_hbm [thread:$0]  %s1835, 128, %s1832, %s1808
        $region84: #{tpu_custom_call.1} parent=71 // pred_fallthru
          _
      $region72: #{tpu_custom_call.1} parent=5 // pred_fallthru
        _
      %p1838 = scmp.le.s32.totalorder 2, %s30
      // Predicated region
      $region85: #{tpu_custom_call.1} parent=5 // pred_check
        %p1839 = pneg %p1838
      $region86: #{tpu_custom_call.1} parent=5 // pred_check_branch
        %1841 = sbr.rel (%p1839) target = $region88
      $region87: #{tpu_custom_call.1} parent=5 // pred_region
        %s1842 = ssub.s32 %s30, 2
        // Predicated region
        $region89: #{tpu_custom_call.1} parent=87 // pred_check
          %p1843 = pneg %p337
        $region90: #{tpu_custom_call.1} parent=87 // pred_check_branch
          %1845 = sbr.rel (%p1843) target = $region92
        $region91: #{tpu_custom_call.1} parent=87 // pred_region
          %s1846 = sand.u32 %s322, 1
          %s1847 = scalar_lea.sflag [#allocation4], %s1846
          %s1848 = sand.u32 %s322, 1
          %s1849 = smul.addr %s1848, 8
          %s1850 = scalar_lea.vmem [#allocation5], %s1849
          %1851 = dma.done %s1847, 128
        $region92: #{tpu_custom_call.1} parent=87 // pred_fallthru
          _
        // Predicated region
        $region93: #{tpu_custom_call.1} parent=87 // pred_check
          %p1852 = pneg %p363
        $region94: #{tpu_custom_call.1} parent=87 // pred_check_branch
          %1854 = sbr.rel (%p1852) target = $region96
        $region95: #{tpu_custom_call.1} parent=87 // pred_region
          %s1855 = sand.u32 %s348, 1
          %s1856 = scalar_lea.sflag [#allocation7], %s1855
          %s1857 = sand.u32 %s348, 1
          %s1858 = smul.addr %s1857, 8
          %s1859 = scalar_lea.vmem [#allocation6], %s1858
          %1860 = dma.done %s1856, 128
        $region96: #{tpu_custom_call.1} parent=87 // pred_fallthru
          _
      $region88: #{tpu_custom_call.1} parent=5 // pred_fallthru
        _
    $region6: #{tpu_custom_call.1} parent=1 // loop_footer
      %s34 = sadd.s32 1, %s30
    $region7: #{tpu_custom_call.1} parent=1 // loop_footer_branch
      %29 = sbr.rel target = $region3
    $region8: #{tpu_custom_call.1} parent=1 // loop_exit
      _
    %1861 = vsyncpa [#allocation3], 1
    %s1862 = scalar_lea.sflag [#allocation3], 1
    %1863 = vsyncpa %s1862, 1
    %1864 = vsyncpa [#allocation4], 1
    %s1865 = scalar_lea.sflag [#allocation4], 1
    %1866 = vsyncpa %s1865, 1
    %1867 = vsyncpa [#allocation7], 1
    %s1868 = scalar_lea.sflag [#allocation7], 1
    %1869 = vsyncpa %s1868, 1

</llo_original>
